<compile_context>
chip_gen: v7x
topology: tpu7x:2x2x1
jax: 0.10.0
libtpu: 0.0.40
codegen_flags: <defaults>
</compile_context>

<pallas_src>
import numpy as np

import jax
import jax.numpy as jnp
from jax.experimental import pallas as pl
from jax.experimental.pallas import tpu as pltpu


TRUNK_CH = (16, 32, 64)        # scaled-down Hiera stage widths (strides 4/8/16)
D_MODEL = 32                   # scaled-down neck d_model (real SAM2: 256)
S0_CH, S1_CH = 8, 16           # scaled-down conv_s0 / conv_s1 out chans (32/64)


# ---------------------------------------------------------------------------
# Single fused kernel: all three pyramid levels for one spatial band.
#   t0 = gelu(x  @ wp + bp)         ; fpn0 = t0 @ wf0 + bf0   (neck0*conv_s0)
#   t1 = gelu(sum_p t0[p] @ wd0[p] + bd0) ; fpn1 = t1 @ wf1 + bf1 (neck1*conv_s1)
#   t2 = gelu(sum_p t1[p] @ wd1[p] + bd1) ; fpn2 = t2 @ wn2 + bn2 (+no_mem folded)
# Rows are phase-major ordered, so the per-phase operands are contiguous
# row blocks (static slices) -- the downsample needs no in-kernel shuffles.
# ---------------------------------------------------------------------------
def _encoder_kernel(x_ref, wp_ref, bp_ref, wf0_ref, bf0_ref,
                    wd0_ref, bd0_ref, wf1_ref, bf1_ref,
                    wd1_ref, bd1_ref, wn2_ref, bn2_ref,
                    fpn0_ref, fpn1_ref, fpn2_ref):
    g0 = x_ref.shape[0]
    g1, g2 = g0 // 4, g0 // 16

    # ---- level 0 (stride 4): patch embed + fused neck0*conv_s0 -------------
    # bf16 MXU inputs, f32 accumulation, f32 bias/GELU math.
    t0 = jnp.dot(x_ref[...], wp_ref[...], preferred_element_type=jnp.float32)
    # TODO(synk): PyTorch nn.GELU defaults to exact erf; the tanh approximation
    # is kept (the stand-in trunk is synthetic anyway, see forward()).
    t0 = jax.nn.gelu(t0 + bp_ref[...]).astype(jnp.bfloat16)
    y0 = jnp.dot(t0, wf0_ref[...], preferred_element_type=jnp.float32)
    fpn0_ref[...] = (y0 + bf0_ref[...]).astype(fpn0_ref.dtype)

    # ---- level 1 (stride 8): 2x2/stride-2 downsample as 4 phase matmuls ----
    x1 = jnp.dot(t0[0:g1, :], wd0_ref[0], preferred_element_type=jnp.float32)
    for p in range(1, 4):
        x1 = x1 + jnp.dot(t0[p * g1:(p + 1) * g1, :], wd0_ref[p],
                          preferred_element_type=jnp.float32)
    t1 = jax.nn.gelu(x1 + bd0_ref[...]).astype(jnp.bfloat16)
    y1 = jnp.dot(t1, wf1_ref[...], preferred_element_type=jnp.float32)
    fpn1_ref[...] = (y1 + bf1_ref[...]).astype(fpn1_ref.dtype)

    # ---- level 2 (stride 16): downsample + neck2 (no_mem_embed in bias) ----
    x2 = jnp.dot(t1[0:g2, :], wd1_ref[0], preferred_element_type=jnp.float32)
    for p in range(1, 4):
        x2 = x2 + jnp.dot(t1[p * g2:(p + 1) * g2, :], wd1_ref[p],
                          preferred_element_type=jnp.float32)
    t2 = jax.nn.gelu(x2 + bd1_ref[...]).astype(jnp.bfloat16)
    y2 = jnp.dot(t2, wn2_ref[...], preferred_element_type=jnp.float32)
    fpn2_ref[...] = (y2 + bn2_ref[...]).astype(fpn2_ref.dtype)


# ---------------------------------------------------------------------------
# Trace-time helpers (all static numpy / Python)
# ---------------------------------------------------------------------------
def _target_tile_rows():
    """Generation-aware level-0 rows-per-tile target."""
    try:
        kind = jax.devices()[0].device_kind.lower()
    except Exception:
        return 512
    if "7" in kind:          # v7x: 64 MiB VMEM, 2 TCs -> keep tiles modest
        return 512
    return 1024              # v5e/v6e: 128 MiB VMEM -> bigger tiles


def _pick_tile_rows(H0, W0, target_rows):
    """Rows of the stride-4 grid per tile: th0 | H0, th0 % 4 == 0, and the
    grid has >=2 steps when possible (so v7x megacore can shard it)."""
    cands = [d for d in range(4, H0 + 1, 4) if H0 % d == 0]
    assert cands, "H/4 and W/4 must be multiples of 4"
    fits = [d for d in cands if d * W0 <= target_rows]
    th0 = max(fits) if fits else cands[0]
    while H0 // th0 < 2:
        smaller = [d for d in cands if d < th0]
        if not smaller:
            break
        th0 = max(smaller)
    return th0


def _build_row_orders(H0, W0, th0):
    """Nested phase-major row orders per spatial band of th0 stride-4 rows.

    perm0[k] / perm1[k] / perm2[k] give the standard row-major flat index of
    the k-th kernel row at levels 0/1/2.  Within a band, level-2 rows are
    row-major; level-1 rows are [phase(0,0), (0,1), (1,0), (1,1)] each in
    level-2 order; level-0 rows likewise over level-1 order.  This makes the
    2x2 downsample a sum of 4 contiguous-row-block matmuls in the kernel.
    """
    perm0, perm1, perm2 = [], [], []
    for band in range(H0 // th0):
        h2_base = band * th0 // 4
        lvl2 = [(h2_base + a, b)
                for a in range(th0 // 4) for b in range(W0 // 4)]
        perm2 += [h2 * (W0 // 4) + w2 for (h2, w2) in lvl2]
        lvl1 = []
        for dy in (0, 1):
            for dx in (0, 1):
                lvl1 += [(2 * h2 + dy, 2 * w2 + dx) for (h2, w2) in lvl2]
        perm1 += [h1 * (W0 // 2) + w1 for (h1, w1) in lvl1]
        for dy in (0, 1):
            for dx in (0, 1):
                perm0 += [(2 * h1 + dy) * W0 + (2 * w1 + dx)
                          for (h1, w1) in lvl1]
    return (np.asarray(perm0, np.int32), np.asarray(perm1, np.int32),
            np.asarray(perm2, np.int32))


def _vmem_limit_bytes(g0, k0):
    """Explicit scoped-VMEM budget from the tile footprint (with headroom)."""
    act = 2  # bf16 bytes
    c1a, c1b, c1c = TRUNK_CH
    tiles = 2 * (g0 * k0 * act                       # x tile, double-buffered
                 + g0 * S0_CH * act + (g0 // 4) * S1_CH * act
                 + (g0 // 16) * D_MODEL * act)       # out tiles, double-buffered
    w = 2 * ((k0 * c1a + c1a * S0_CH + 4 * c1a * c1b + c1b * S1_CH
              + 4 * c1b * c1c + c1c * D_MODEL) * act
             + (c1a + S0_CH + c1b + S1_CH + c1c + D_MODEL) * 4)
    inter = g0 * c1a * 6 + (g0 // 4) * c1b * 6 + (g0 // 16) * c1c * 6 \
        + g0 * S0_CH * 4
    total = 2 * (tiles + w + inter)
    return int(min(96 << 20, max(8 << 20, total)))


# ---------------------------------------------------------------------------
# pallas_call wrapper
# ---------------------------------------------------------------------------
def encoder_fused(xk, wp, bp, wf0, bf0, wd0, bd0, wf1, bf1, wd1, bd1,
                  wn2, bn2, *, tile_rows):
    M0, K0 = xk.shape
    assert M0 % tile_rows == 0 and tile_rows % 16 == 0
    g0 = tile_rows

    def row_spec(rows, cols):
        return pl.BlockSpec((rows, cols), lambda i: (i, 0))

    def const_spec(arr):
        shape = arr.shape
        return pl.BlockSpec(shape, lambda i: (0,) * len(shape))

    in_specs = [
        row_spec(g0, K0),
        const_spec(wp), const_spec(bp),
        const_spec(wf0), const_spec(bf0),
        const_spec(wd0), const_spec(bd0),
        const_spec(wf1), const_spec(bf1),
        const_spec(wd1), const_spec(bd1),
        const_spec(wn2), const_spec(bn2),
    ]
    out_shapes = (
        jax.ShapeDtypeStruct((M0, S0_CH), jnp.bfloat16),
        jax.ShapeDtypeStruct((M0 // 4, S1_CH), jnp.bfloat16),
        jax.ShapeDtypeStruct((M0 // 16, D_MODEL), jnp.bfloat16),
    )
    out_specs = (
        row_spec(g0, S0_CH),
        row_spec(g0 // 4, S1_CH),
        row_spec(g0 // 16, D_MODEL),
    )

    # TODO(synk): at real SAM2 widths (K up to ~4608, d_model 256) add a K-split
    # grid axis marked "arbitrary" with an f32 VMEM accumulator so the
    # (double-buffered) weight blocks fit v7x's 64 MiB VMEM.
    return pl.pallas_call(
        _encoder_kernel,
        out_shape=out_shapes,
        grid=(M0 // g0,),
        in_specs=in_specs,
        out_specs=out_specs,
        compiler_params=pltpu.CompilerParams(
            dimension_semantics=("parallel",),
            vmem_limit_bytes=_vmem_limit_bytes(g0, K0)),
    )(xk, wp, bp, wf0, bf0, wd0, bd0, wf1, bf1, wd1, bd1, wn2, bn2)


# ---------------------------------------------------------------------------
# Glue helpers
# ---------------------------------------------------------------------------
def space_to_depth(x, k):
    """NHWC space-to-depth (used ONCE, on the input image, for the stride-4
    patch embed; the inter-level shuffles are fused into the kernel)."""
    B, H, W, C = x.shape
    x = x.reshape(B, H // k, k, W // k, k, C)
    x = jnp.transpose(x, (0, 1, 3, 2, 4, 5))
    return x.reshape(B, H // k, W // k, k * k * C)


def init_params(key):
    """Deterministic synthetic parameters (shapes follow the SAM2 encoder).

    The dead stride-32 branch (down2 / neck3) is not generated: scalp=1 drops
    it from backbone_fpn, and the FpnNeck top-down fusion that would have
    consumed it is omitted (see TODO in image_encoder_forward).
    """
    ks = iter(jax.random.split(key, 24))

    def dense(k, fan_in, fan_out):
        return jax.random.normal(k, (fan_in, fan_out), jnp.float32) / jnp.sqrt(
            jnp.float32(fan_in))

    def bias(k, n):
        return 0.01 * jax.random.normal(k, (n,), jnp.float32)

    p = {}
    p["patch_w"] = dense(next(ks), 3 * 4 * 4, TRUNK_CH[0])
    p["patch_b"] = bias(next(ks), TRUNK_CH[0])
    for i in range(2):
        p[f"down{i}_w"] = dense(next(ks), TRUNK_CH[i] * 4, TRUNK_CH[i + 1])
        p[f"down{i}_b"] = bias(next(ks), TRUNK_CH[i + 1])
    for i in range(3):
        p[f"neck{i}_w"] = dense(next(ks), TRUNK_CH[i], D_MODEL)
        p[f"neck{i}_b"] = bias(next(ks), D_MODEL)
    p["s0_w"] = dense(next(ks), D_MODEL, S0_CH)
    p["s0_b"] = bias(next(ks), S0_CH)
    p["s1_w"] = dense(next(ks), D_MODEL, S1_CH)
    p["s1_b"] = bias(next(ks), S1_CH)
    p["no_mem_embed"] = 0.02 * jax.random.normal(next(ks), (1, 1, D_MODEL),
                                                 jnp.float32)
    return p


# ---------------------------------------------------------------------------
# ImageEncoder.forward
# ---------------------------------------------------------------------------
def image_encoder_forward(x_nchw, p):
    B, _, H, W = x_nchw.shape
    assert B == 1, "SAM2 ImageEncoder export hardcodes batch 1 (view(1,-1,H,W))"
    assert H % 16 == 0 and W % 16 == 0
    H0, W0 = H // 4, W // 4
    H1, W1 = H // 8, W // 8
    H2, W2 = H // 16, W // 16
    M0 = H0 * W0

    # ---- patch extraction: NCHW -> NHWC -> s2d(4) -> (M0, 48) bf16 rows -----
    x = jnp.transpose(x_nchw, (0, 2, 3, 1)).astype(jnp.bfloat16)
    x = space_to_depth(x, 4).reshape(M0, 3 * 16)

    # ---- nested phase-major row order (static, trace time) ------------------
    th0 = _pick_tile_rows(H0, W0, _target_tile_rows())
    perm0, perm1, perm2 = _build_row_orders(H0, W0, th0)
    xk = jnp.take(x, jnp.asarray(perm0), axis=0)

    bf16 = lambda a: a.astype(jnp.bfloat16)
    f32row = lambda a: a.reshape(1, -1).astype(jnp.float32)

    # Fold conv_s0 into neck0 and conv_s1 into neck1 (no activation between):
    #   (f @ nw + nb) @ sw + sb == f @ (nw @ sw) + (nb @ sw + sb)
    w_fpn0 = p["neck0_w"] @ p["s0_w"]
    b_fpn0 = p["neck0_b"] @ p["s0_w"] + p["s0_b"]
    w_fpn1 = p["neck1_w"] @ p["s1_w"]
    b_fpn1 = p["neck1_b"] @ p["s1_w"] + p["s1_b"]
    # Fold `vision_feats[-1] += no_mem_embed` (directly_add_no_mem_embed,
    # a pure per-channel broadcast on the stride-16 level) into the neck2 bias.
    b_neck2 = p["neck2_b"] + p["no_mem_embed"].reshape(-1)

    # Downsample weights split per 2x2 phase (rows ordered (dy, dx, c)).
    w_d0 = bf16(p["down0_w"].reshape(4, TRUNK_CH[0], TRUNK_CH[1]))
    w_d1 = bf16(p["down1_w"].reshape(4, TRUNK_CH[1], TRUNK_CH[2]))

    # TODO(synk): the real SAM2 Hiera trunk (windowed self-attention blocks) is
    # not reproducible without the checkpoint; a shape-matched strided-conv
    # trunk (patch embed stride 4, then 2x2/stride-2 downsamples) stands in.
    # TODO(synk): the FpnNeck top-down nearest-interp fusion is omitted; the
    # lateral 1x1 projections (the matmul hot path) are kept.
    fpn0k, fpn1k, fpn2k = encoder_fused(
        xk,
        bf16(p["patch_w"]), f32row(p["patch_b"]),
        bf16(w_fpn0), f32row(b_fpn0),
        w_d0, f32row(p["down0_b"]),
        bf16(w_fpn1), f32row(b_fpn1),
        w_d1, f32row(p["down1_b"]),
        bf16(p["neck2_w"]), f32row(b_neck2),
        tile_rows=th0 * W0)

    # ---- un-permute + _prepare_backbone_features + permute/view to NCHW -----
    def to_nchw(yk, perm, h, w, c):
        inv = jnp.asarray(np.argsort(perm).astype(np.int32))
        y = jnp.take(yk, inv, axis=0).astype(jnp.float32)
        return jnp.transpose(y.reshape(1, h, w, c), (0, 3, 1, 2))

    high_res_features1 = to_nchw(fpn0k, perm0, H0, W0, S0_CH)   # feats[0]
    high_res_features2 = to_nchw(fpn1k, perm1, H1, W1, S1_CH)   # feats[1]
    image_embeddings = to_nchw(fpn2k, perm2, H2, W2, D_MODEL)   # feats[2]
    return image_embeddings, high_res_features1, high_res_features2


if __name__ == "__main__":
    key = jax.random.PRNGKey(0)
    kx, kp = jax.random.split(key)
    H = W = 64                                   # scaled-down image (real: 1024)
    x = jax.random.normal(kx, (1, 3, H, W), jnp.float32)   # NCHW, like PyTorch
    params = init_params(kp)

    fwd = jax.jit(image_encoder_forward)
    image_embeddings, hr1, hr2 = fwd(x, params)
    jax.block_until_ready((image_embeddings, hr1, hr2))

    assert image_embeddings.shape == (1, D_MODEL, H // 16, W // 16)
    assert hr1.shape == (1, S0_CH, H // 4, W // 4)
    assert hr2.shape == (1, S1_CH, H // 8, W // 8)
    assert image_embeddings.dtype == jnp.float32
    assert jnp.all(jnp.isfinite(image_embeddings))
    assert jnp.all(jnp.isfinite(hr1))
    assert jnp.all(jnp.isfinite(hr2))
    print("KERNEL_OK")
</pallas_src>

<mosaic_0001>
module attributes {stable_mosaic.version = 11 : i64} {
  func.func @_encoder_kernel(%arg0: i32, %arg1: memref<128x48xbf16, #tpu.memory_space<vmem>>, %arg2: memref<48x16xbf16, #tpu.memory_space<vmem>>, %arg3: memref<1x16xf32, #tpu.memory_space<vmem>>, %arg4: memref<16x8xbf16, #tpu.memory_space<vmem>>, %arg5: memref<1x8xf32, #tpu.memory_space<vmem>>, %arg6: memref<4x16x32xbf16, #tpu.memory_space<vmem>>, %arg7: memref<1x32xf32, #tpu.memory_space<vmem>>, %arg8: memref<32x16xbf16, #tpu.memory_space<vmem>>, %arg9: memref<1x16xf32, #tpu.memory_space<vmem>>, %arg10: memref<4x32x64xbf16, #tpu.memory_space<vmem>>, %arg11: memref<1x64xf32, #tpu.memory_space<vmem>>, %arg12: memref<64x32xbf16, #tpu.memory_space<vmem>>, %arg13: memref<1x32xf32, #tpu.memory_space<vmem>>, %arg14: memref<128x8xbf16, #tpu.memory_space<vmem>>, %arg15: memref<32x16xbf16, #tpu.memory_space<vmem>>, %arg16: memref<8x32xbf16, #tpu.memory_space<vmem>>) attributes {dimension_semantics = [#tpu.dimension_semantics<parallel>], iteration_bounds = array<i64: 2>, scalar_prefetch = 0 : i64, scratch_operands = 0 : i64, tpu.core_type = #tpu.core_type<tc>, window_params = [{transform_indices = @transform_0, window_bounds = array<i64: 128, 48>}, {pipeline_mode = #tpu.pipeline_mode<synchronous>, transform_indices = @transform_1, window_bounds = array<i64: 48, 16>}, {pipeline_mode = #tpu.pipeline_mode<synchronous>, transform_indices = @transform_2, window_bounds = array<i64: 1, 16>}, {pipeline_mode = #tpu.pipeline_mode<synchronous>, transform_indices = @transform_3, window_bounds = array<i64: 16, 8>}, {pipeline_mode = #tpu.pipeline_mode<synchronous>, transform_indices = @transform_4, window_bounds = array<i64: 1, 8>}, {pipeline_mode = #tpu.pipeline_mode<synchronous>, transform_indices = @transform_5, window_bounds = array<i64: 4, 16, 32>}, {pipeline_mode = #tpu.pipeline_mode<synchronous>, transform_indices = @transform_6, window_bounds = array<i64: 1, 32>}, {pipeline_mode = #tpu.pipeline_mode<synchronous>, transform_indices = @transform_7, window_bounds = array<i64: 32, 16>}, {pipeline_mode = #tpu.pipeline_mode<synchronous>, transform_indices = @transform_8, window_bounds = array<i64: 1, 16>}, {pipeline_mode = #tpu.pipeline_mode<synchronous>, transform_indices = @transform_9, window_bounds = array<i64: 4, 32, 64>}, {pipeline_mode = #tpu.pipeline_mode<synchronous>, transform_indices = @transform_10, window_bounds = array<i64: 1, 64>}, {pipeline_mode = #tpu.pipeline_mode<synchronous>, transform_indices = @transform_11, window_bounds = array<i64: 64, 32>}, {pipeline_mode = #tpu.pipeline_mode<synchronous>, transform_indices = @transform_12, window_bounds = array<i64: 1, 32>}, {transform_indices = @transform_13, window_bounds = array<i64: 128, 8>}, {transform_indices = @transform_14, window_bounds = array<i64: 32, 16>}, {transform_indices = @transform_15, window_bounds = array<i64: 8, 32>}]} {
    %c0 = arith.constant 0 : index
    %c0_0 = arith.constant 0 : index
    %0 = vector.load %arg1[%c0, %c0_0] : memref<128x48xbf16, #tpu.memory_space<vmem>>, vector<128x48xbf16>
    %c0_1 = arith.constant 0 : index
    %c0_2 = arith.constant 0 : index
    %1 = vector.load %arg2[%c0_1, %c0_2] : memref<48x16xbf16, #tpu.memory_space<vmem>>, vector<48x16xbf16>
    %cst = arith.constant dense<0.000000e+00> : vector<128x16xf32>
    %2 = tpu.matmul %0, %1, %cst {dimension_numbers = #tpu.dot_dimension_numbers<[1], [0], [0], [1], [0, 0, 1, 1], [], []>} : vector<128x48xbf16>, vector<48x16xbf16>, vector<128x16xf32> -> vector<128x16xf32>
    %c0_3 = arith.constant 0 : index
    %c0_4 = arith.constant 0 : index
    %3 = vector.load %arg3[%c0_3, %c0_4] : memref<1x16xf32, #tpu.memory_space<vmem>>, vector<1x16xf32>
    %4 = vector.broadcast %3 : vector<1x16xf32> to vector<128x16xf32>
    %5 = arith.addf %2, %4 : vector<128x16xf32>
    %6 = arith.mulf %5, %5 : vector<128x16xf32>
    %7 = arith.mulf %5, %6 : vector<128x16xf32>
    %cst_5 = arith.constant 4.471500e-02 : f32
    %8 = vector.broadcast %cst_5 : f32 to vector<128x16xf32>
    %9 = arith.mulf %8, %7 : vector<128x16xf32>
    %10 = arith.addf %5, %9 : vector<128x16xf32>
    %cst_6 = arith.constant 0.797884583 : f32
    %11 = vector.broadcast %cst_6 : f32 to vector<128x16xf32>
    %12 = arith.mulf %11, %10 : vector<128x16xf32>
    %13 = math.tanh %12 : vector<128x16xf32>
    %cst_7 = arith.constant 1.000000e+00 : f32
    %14 = vector.broadcast %cst_7 : f32 to vector<128x16xf32>
    %15 = arith.addf %14, %13 : vector<128x16xf32>
    %cst_8 = arith.constant 5.000000e-01 : f32
    %16 = vector.broadcast %cst_8 : f32 to vector<128x16xf32>
    %17 = arith.mulf %16, %15 : vector<128x16xf32>
    %18 = arith.mulf %5, %17 : vector<128x16xf32>
    %19 = arith.truncf %18 : vector<128x16xf32> to vector<128x16xbf16>
    %c0_9 = arith.constant 0 : index
    %c0_10 = arith.constant 0 : index
    %20 = vector.load %arg4[%c0_9, %c0_10] : memref<16x8xbf16, #tpu.memory_space<vmem>>, vector<16x8xbf16>
    %cst_11 = arith.constant dense<0.000000e+00> : vector<128x8xf32>
    %21 = tpu.matmul %19, %20, %cst_11 {dimension_numbers = #tpu.dot_dimension_numbers<[1], [0], [0], [1], [0, 0, 1, 1], [], []>} : vector<128x16xbf16>, vector<16x8xbf16>, vector<128x8xf32> -> vector<128x8xf32>
    %c0_12 = arith.constant 0 : index
    %c0_13 = arith.constant 0 : index
    %22 = vector.load %arg5[%c0_12, %c0_13] : memref<1x8xf32, #tpu.memory_space<vmem>>, vector<1x8xf32>
    %23 = vector.broadcast %22 : vector<1x8xf32> to vector<128x8xf32>
    %24 = arith.addf %21, %23 : vector<128x8xf32>
    %25 = arith.truncf %24 : vector<128x8xf32> to vector<128x8xbf16>
    %c0_14 = arith.constant 0 : index
    %c0_15 = arith.constant 0 : index
    %26 = vector.load %arg14[%c0_14, %c0_15] : memref<128x8xbf16, #tpu.memory_space<vmem>>, vector<128x8xbf16>
    tpu.vector_store %arg14[%c0_14, %c0_15], %25 {strides = array<i32>} : memref<128x8xbf16, #tpu.memory_space<vmem>>, vector<128x8xbf16>,
    %27 = vector.extract_strided_slice %19 {offsets = [0, 0], sizes = [32, 16], strides = [1, 1]} : vector<128x16xbf16> to vector<32x16xbf16>
    %c0_16 = arith.constant 0 : index
    %c0_17 = arith.constant 0 : index
    %c0_18 = arith.constant 0 : index
    %28 = vector.load %arg6[%c0_16, %c0_17, %c0_18] : memref<4x16x32xbf16, #tpu.memory_space<vmem>>, vector<1x16x32xbf16>
    %29 = vector.shape_cast %28 : vector<1x16x32xbf16> to vector<16x32xbf16>
    %cst_19 = arith.constant dense<0.000000e+00> : vector<32x32xf32>
    %30 = tpu.matmul %27, %29, %cst_19 {dimension_numbers = #tpu.dot_dimension_numbers<[1], [0], [0], [1], [0, 0, 1, 1], [], []>} : vector<32x16xbf16>, vector<16x32xbf16>, vector<32x32xf32> -> vector<32x32xf32>
    %31 = vector.extract_strided_slice %19 {offsets = [32, 0], sizes = [32, 16], strides = [1, 1]} : vector<128x16xbf16> to vector<32x16xbf16>
    %c1 = arith.constant 1 : index
    %c0_20 = arith.constant 0 : index
    %c0_21 = arith.constant 0 : index
    %32 = vector.load %arg6[%c1, %c0_20, %c0_21] : memref<4x16x32xbf16, #tpu.memory_space<vmem>>, vector<1x16x32xbf16>
    %33 = vector.shape_cast %32 : vector<1x16x32xbf16> to vector<16x32xbf16>
    %cst_22 = arith.constant dense<0.000000e+00> : vector<32x32xf32>
    %34 = tpu.matmul %31, %33, %cst_22 {dimension_numbers = #tpu.dot_dimension_numbers<[1], [0], [0], [1], [0, 0, 1, 1], [], []>} : vector<32x16xbf16>, vector<16x32xbf16>, vector<32x32xf32> -> vector<32x32xf32>
    %35 = arith.addf %30, %34 : vector<32x32xf32>
    %36 = vector.extract_strided_slice %19 {offsets = [64, 0], sizes = [32, 16], strides = [1, 1]} : vector<128x16xbf16> to vector<32x16xbf16>
    %c2 = arith.constant 2 : index
    %c0_23 = arith.constant 0 : index
    %c0_24 = arith.constant 0 : index
    %37 = vector.load %arg6[%c2, %c0_23, %c0_24] : memref<4x16x32xbf16, #tpu.memory_space<vmem>>, vector<1x16x32xbf16>
    %38 = vector.shape_cast %37 : vector<1x16x32xbf16> to vector<16x32xbf16>
    %cst_25 = arith.constant dense<0.000000e+00> : vector<32x32xf32>
    %39 = tpu.matmul %36, %38, %cst_25 {dimension_numbers = #tpu.dot_dimension_numbers<[1], [0], [0], [1], [0, 0, 1, 1], [], []>} : vector<32x16xbf16>, vector<16x32xbf16>, vector<32x32xf32> -> vector<32x32xf32>
    %40 = arith.addf %35, %39 : vector<32x32xf32>
    %41 = vector.extract_strided_slice %19 {offsets = [96, 0], sizes = [32, 16], strides = [1, 1]} : vector<128x16xbf16> to vector<32x16xbf16>
    %c3 = arith.constant 3 : index
    %c0_26 = arith.constant 0 : index
    %c0_27 = arith.constant 0 : index
    %42 = vector.load %arg6[%c3, %c0_26, %c0_27] : memref<4x16x32xbf16, #tpu.memory_space<vmem>>, vector<1x16x32xbf16>
    %43 = vector.shape_cast %42 : vector<1x16x32xbf16> to vector<16x32xbf16>
    %cst_28 = arith.constant dense<0.000000e+00> : vector<32x32xf32>
    %44 = tpu.matmul %41, %43, %cst_28 {dimension_numbers = #tpu.dot_dimension_numbers<[1], [0], [0], [1], [0, 0, 1, 1], [], []>} : vector<32x16xbf16>, vector<16x32xbf16>, vector<32x32xf32> -> vector<32x32xf32>
    %45 = arith.addf %40, %44 : vector<32x32xf32>
    %c0_29 = arith.constant 0 : index
    %c0_30 = arith.constant 0 : index
    %46 = vector.load %arg7[%c0_29, %c0_30] : memref<1x32xf32, #tpu.memory_space<vmem>>, vector<1x32xf32>
    %47 = vector.broadcast %46 : vector<1x32xf32> to vector<32x32xf32>
    %48 = arith.addf %45, %47 : vector<32x32xf32>
    %49 = arith.mulf %48, %48 : vector<32x32xf32>
    %50 = arith.mulf %48, %49 : vector<32x32xf32>
    %cst_31 = arith.constant 4.471500e-02 : f32
    %51 = vector.broadcast %cst_31 : f32 to vector<32x32xf32>
    %52 = arith.mulf %51, %50 : vector<32x32xf32>
    %53 = arith.addf %48, %52 : vector<32x32xf32>
    %cst_32 = arith.constant 0.797884583 : f32
    %54 = vector.broadcast %cst_32 : f32 to vector<32x32xf32>
    %55 = arith.mulf %54, %53 : vector<32x32xf32>
    %56 = math.tanh %55 : vector<32x32xf32>
    %cst_33 = arith.constant 1.000000e+00 : f32
    %57 = vector.broadcast %cst_33 : f32 to vector<32x32xf32>
    %58 = arith.addf %57, %56 : vector<32x32xf32>
    %cst_34 = arith.constant 5.000000e-01 : f32
    %59 = vector.broadcast %cst_34 : f32 to vector<32x32xf32>
    %60 = arith.mulf %59, %58 : vector<32x32xf32>
    %61 = arith.mulf %48, %60 : vector<32x32xf32>
    %62 = arith.truncf %61 : vector<32x32xf32> to vector<32x32xbf16>
    %c0_35 = arith.constant 0 : index
    %c0_36 = arith.constant 0 : index
    %63 = vector.load %arg8[%c0_35, %c0_36] : memref<32x16xbf16, #tpu.memory_space<vmem>>, vector<32x16xbf16>
    %cst_37 = arith.constant dense<0.000000e+00> : vector<32x16xf32>
    %64 = tpu.matmul %62, %63, %cst_37 {dimension_numbers = #tpu.dot_dimension_numbers<[1], [0], [0], [1], [0, 0, 1, 1], [], []>} : vector<32x32xbf16>, vector<32x16xbf16>, vector<32x16xf32> -> vector<32x16xf32>
    %c0_38 = arith.constant 0 : index
    %c0_39 = arith.constant 0 : index
    %65 = vector.load %arg9[%c0_38, %c0_39] : memref<1x16xf32, #tpu.memory_space<vmem>>, vector<1x16xf32>
    %66 = vector.broadcast %65 : vector<1x16xf32> to vector<32x16xf32>
    %67 = arith.addf %64, %66 : vector<32x16xf32>
    %68 = arith.truncf %67 : vector<32x16xf32> to vector<32x16xbf16>
    %c0_40 = arith.constant 0 : index
    %c0_41 = arith.constant 0 : index
    %69 = vector.load %arg15[%c0_40, %c0_41] : memref<32x16xbf16, #tpu.memory_space<vmem>>, vector<32x16xbf16>
    tpu.vector_store %arg15[%c0_40, %c0_41], %68 {strides = array<i32>} : memref<32x16xbf16, #tpu.memory_space<vmem>>, vector<32x16xbf16>,
    %70 = vector.extract_strided_slice %62 {offsets = [0, 0], sizes = [8, 32], strides = [1, 1]} : vector<32x32xbf16> to vector<8x32xbf16>
    %c0_42 = arith.constant 0 : index
    %c0_43 = arith.constant 0 : index
    %c0_44 = arith.constant 0 : index
    %71 = vector.load %arg10[%c0_42, %c0_43, %c0_44] : memref<4x32x64xbf16, #tpu.memory_space<vmem>>, vector<1x32x64xbf16>
    %72 = vector.shape_cast %71 : vector<1x32x64xbf16> to vector<32x64xbf16>
    %cst_45 = arith.constant dense<0.000000e+00> : vector<8x64xf32>
    %73 = tpu.matmul %70, %72, %cst_45 {dimension_numbers = #tpu.dot_dimension_numbers<[1], [0], [0], [1], [0, 0, 1, 1], [], []>} : vector<8x32xbf16>, vector<32x64xbf16>, vector<8x64xf32> -> vector<8x64xf32>
    %74 = vector.extract_strided_slice %62 {offsets = [8, 0], sizes = [8, 32], strides = [1, 1]} : vector<32x32xbf16> to vector<8x32xbf16>
    %c1_46 = arith.constant 1 : index
    %c0_47 = arith.constant 0 : index
    %c0_48 = arith.constant 0 : index
    %75 = vector.load %arg10[%c1_46, %c0_47, %c0_48] : memref<4x32x64xbf16, #tpu.memory_space<vmem>>, vector<1x32x64xbf16>
    %76 = vector.shape_cast %75 : vector<1x32x64xbf16> to vector<32x64xbf16>
    %cst_49 = arith.constant dense<0.000000e+00> : vector<8x64xf32>
    %77 = tpu.matmul %74, %76, %cst_49 {dimension_numbers = #tpu.dot_dimension_numbers<[1], [0], [0], [1], [0, 0, 1, 1], [], []>} : vector<8x32xbf16>, vector<32x64xbf16>, vector<8x64xf32> -> vector<8x64xf32>
    %78 = arith.addf %73, %77 : vector<8x64xf32>
    %79 = vector.extract_strided_slice %62 {offsets = [16, 0], sizes = [8, 32], strides = [1, 1]} : vector<32x32xbf16> to vector<8x32xbf16>
    %c2_50 = arith.constant 2 : index
    %c0_51 = arith.constant 0 : index
    %c0_52 = arith.constant 0 : index
    %80 = vector.load %arg10[%c2_50, %c0_51, %c0_52] : memref<4x32x64xbf16, #tpu.memory_space<vmem>>, vector<1x32x64xbf16>
    %81 = vector.shape_cast %80 : vector<1x32x64xbf16> to vector<32x64xbf16>
    %cst_53 = arith.constant dense<0.000000e+00> : vector<8x64xf32>
    %82 = tpu.matmul %79, %81, %cst_53 {dimension_numbers = #tpu.dot_dimension_numbers<[1], [0], [0], [1], [0, 0, 1, 1], [], []>} : vector<8x32xbf16>, vector<32x64xbf16>, vector<8x64xf32> -> vector<8x64xf32>
    %83 = arith.addf %78, %82 : vector<8x64xf32>
    %84 = vector.extract_strided_slice %62 {offsets = [24, 0], sizes = [8, 32], strides = [1, 1]} : vector<32x32xbf16> to vector<8x32xbf16>
    %c3_54 = arith.constant 3 : index
    %c0_55 = arith.constant 0 : index
    %c0_56 = arith.constant 0 : index
    %85 = vector.load %arg10[%c3_54, %c0_55, %c0_56] : memref<4x32x64xbf16, #tpu.memory_space<vmem>>, vector<1x32x64xbf16>
    %86 = vector.shape_cast %85 : vector<1x32x64xbf16> to vector<32x64xbf16>
    %cst_57 = arith.constant dense<0.000000e+00> : vector<8x64xf32>
    %87 = tpu.matmul %84, %86, %cst_57 {dimension_numbers = #tpu.dot_dimension_numbers<[1], [0], [0], [1], [0, 0, 1, 1], [], []>} : vector<8x32xbf16>, vector<32x64xbf16>, vector<8x64xf32> -> vector<8x64xf32>
    %88 = arith.addf %83, %87 : vector<8x64xf32>
    %c0_58 = arith.constant 0 : index
    %c0_59 = arith.constant 0 : index
    %89 = vector.load %arg11[%c0_58, %c0_59] : memref<1x64xf32, #tpu.memory_space<vmem>>, vector<1x64xf32>
    %90 = vector.broadcast %89 : vector<1x64xf32> to vector<8x64xf32>
    %91 = arith.addf %88, %90 : vector<8x64xf32>
    %92 = arith.mulf %91, %91 : vector<8x64xf32>
    %93 = arith.mulf %91, %92 : vector<8x64xf32>
    %cst_60 = arith.constant 4.471500e-02 : f32
    %94 = vector.broadcast %cst_60 : f32 to vector<8x64xf32>
    %95 = arith.mulf %94, %93 : vector<8x64xf32>
    %96 = arith.addf %91, %95 : vector<8x64xf32>
    %cst_61 = arith.constant 0.797884583 : f32
    %97 = vector.broadcast %cst_61 : f32 to vector<8x64xf32>
    %98 = arith.mulf %97, %96 : vector<8x64xf32>
    %99 = math.tanh %98 : vector<8x64xf32>
    %cst_62 = arith.constant 1.000000e+00 : f32
    %100 = vector.broadcast %cst_62 : f32 to vector<8x64xf32>
    %101 = arith.addf %100, %99 : vector<8x64xf32>
    %cst_63 = arith.constant 5.000000e-01 : f32
    %102 = vector.broadcast %cst_63 : f32 to vector<8x64xf32>
    %103 = arith.mulf %102, %101 : vector<8x64xf32>
    %104 = arith.mulf %91, %103 : vector<8x64xf32>
    %105 = arith.truncf %104 : vector<8x64xf32> to vector<8x64xbf16>
    %c0_64 = arith.constant 0 : index
    %c0_65 = arith.constant 0 : index
    %106 = vector.load %arg12[%c0_64, %c0_65] : memref<64x32xbf16, #tpu.memory_space<vmem>>, vector<64x32xbf16>
    %cst_66 = arith.constant dense<0.000000e+00> : vector<8x32xf32>
    %107 = tpu.matmul %105, %106, %cst_66 {dimension_numbers = #tpu.dot_dimension_numbers<[1], [0], [0], [1], [0, 0, 1, 1], [], []>} : vector<8x64xbf16>, vector<64x32xbf16>, vector<8x32xf32> -> vector<8x32xf32>
    %c0_67 = arith.constant 0 : index
    %c0_68 = arith.constant 0 : index
    %108 = vector.load %arg13[%c0_67, %c0_68] : memref<1x32xf32, #tpu.memory_space<vmem>>, vector<1x32xf32>
    %109 = vector.broadcast %108 : vector<1x32xf32> to vector<8x32xf32>
    %110 = arith.addf %107, %109 : vector<8x32xf32>
    %111 = arith.truncf %110 : vector<8x32xf32> to vector<8x32xbf16>
    %c0_69 = arith.constant 0 : index
    %c0_70 = arith.constant 0 : index
    %112 = vector.load %arg16[%c0_69, %c0_70] : memref<8x32xbf16, #tpu.memory_space<vmem>>, vector<8x32xbf16>
    tpu.vector_store %arg16[%c0_69, %c0_70], %111 {strides = array<i32>} : memref<8x32xbf16, #tpu.memory_space<vmem>>, vector<8x32xbf16>,
    return
  }
  func.func @transform_0(%arg0: i32) -> (i32, i32) {
    %c0_i32 = arith.constant 0 : i32
    %c0_i32_0 = arith.constant 0 : i32
    return %arg0, %c0_i32 : i32, i32
  }
  func.func @transform_1(%arg0: i32) -> (i32, i32) {
    %c0_i32 = arith.constant 0 : i32
    %c0_i32_0 = arith.constant 0 : i32
    %c0_i32_1 = arith.constant 0 : i32
    return %c0_i32, %c0_i32_0 : i32, i32
  }
  func.func @transform_2(%arg0: i32) -> (i32, i32) {
    %c0_i32 = arith.constant 0 : i32
    %c0_i32_0 = arith.constant 0 : i32
    %c0_i32_1 = arith.constant 0 : i32
    return %c0_i32, %c0_i32_0 : i32, i32
  }
  func.func @transform_3(%arg0: i32) -> (i32, i32) {
    %c0_i32 = arith.constant 0 : i32
    %c0_i32_0 = arith.constant 0 : i32
    %c0_i32_1 = arith.constant 0 : i32
    return %c0_i32, %c0_i32_0 : i32, i32
  }
  func.func @transform_4(%arg0: i32) -> (i32, i32) {
    %c0_i32 = arith.constant 0 : i32
    %c0_i32_0 = arith.constant 0 : i32
    %c0_i32_1 = arith.constant 0 : i32
    return %c0_i32, %c0_i32_0 : i32, i32
  }
  func.func @transform_5(%arg0: i32) -> (i32, i32, i32) {
    %c0_i32 = arith.constant 0 : i32
    %c0_i32_0 = arith.constant 0 : i32
    %c0_i32_1 = arith.constant 0 : i32
    %c0_i32_2 = arith.constant 0 : i32
    return %c0_i32, %c0_i32_0, %c0_i32_1 : i32, i32, i32
  }
  func.func @transform_6(%arg0: i32) -> (i32, i32) {
    %c0_i32 = arith.constant 0 : i32
    %c0_i32_0 = arith.constant 0 : i32
    %c0_i32_1 = arith.constant 0 : i32
    return %c0_i32, %c0_i32_0 : i32, i32
  }
  func.func @transform_7(%arg0: i32) -> (i32, i32) {
    %c0_i32 = arith.constant 0 : i32
    %c0_i32_0 = arith.constant 0 : i32
    %c0_i32_1 = arith.constant 0 : i32
    return %c0_i32, %c0_i32_0 : i32, i32
  }
  func.func @transform_8(%arg0: i32) -> (i32, i32) {
    %c0_i32 = arith.constant 0 : i32
    %c0_i32_0 = arith.constant 0 : i32
    %c0_i32_1 = arith.constant 0 : i32
    return %c0_i32, %c0_i32_0 : i32, i32
  }
  func.func @transform_9(%arg0: i32) -> (i32, i32, i32) {
    %c0_i32 = arith.constant 0 : i32
    %c0_i32_0 = arith.constant 0 : i32
    %c0_i32_1 = arith.constant 0 : i32
    %c0_i32_2 = arith.constant 0 : i32
    return %c0_i32, %c0_i32_0, %c0_i32_1 : i32, i32, i32
  }
  func.func @transform_10(%arg0: i32) -> (i32, i32) {
    %c0_i32 = arith.constant 0 : i32
    %c0_i32_0 = arith.constant 0 : i32
    %c0_i32_1 = arith.constant 0 : i32
    return %c0_i32, %c0_i32_0 : i32, i32
  }
  func.func @transform_11(%arg0: i32) -> (i32, i32) {
    %c0_i32 = arith.constant 0 : i32
    %c0_i32_0 = arith.constant 0 : i32
    %c0_i32_1 = arith.constant 0 : i32
    return %c0_i32, %c0_i32_0 : i32, i32
  }
  func.func @transform_12(%arg0: i32) -> (i32, i32) {
    %c0_i32 = arith.constant 0 : i32
    %c0_i32_0 = arith.constant 0 : i32
    %c0_i32_1 = arith.constant 0 : i32
    return %c0_i32, %c0_i32_0 : i32, i32
  }
  func.func @transform_13(%arg0: i32) -> (i32, i32) {
    %c0_i32 = arith.constant 0 : i32
    %c0_i32_0 = arith.constant 0 : i32
    return %arg0, %c0_i32 : i32, i32
  }
  func.func @transform_14(%arg0: i32) -> (i32, i32) {
    %c0_i32 = arith.constant 0 : i32
    %c0_i32_0 = arith.constant 0 : i32
    return %arg0, %c0_i32 : i32, i32
  }
  func.func @transform_15(%arg0: i32) -> (i32, i32) {
    %c0_i32 = arith.constant 0 : i32
    %c0_i32_0 = arith.constant 0 : i32
    return %arg0, %c0_i32 : i32, i32
  }
}

</mosaic_0001>

<llo_original>
// kernel: image_encoder_forward.1
$region0: #{image_encoder_forward.1}
  #allocation0 [shape = 'u32[]', space=smem, size = 0x4, offset = 0x4, fixed_abs, tag = 'smem constant byte address 0x4 - core index']
  #allocation1 [shape = 'u32[144,128]{1,0:T(1,128)}', space=vmem, size = 0x12000, scoped, tag = 'internal scratch']
  %s0 = inlined_call_operand.vmem [shape: bf16[256,48], index: 0, kind: input, shape index: {}]
  %s1 = inlined_call_operand.vmem [shape: bf16[48,16], index: 1, kind: input, shape index: {}]
  %s2 = inlined_call_operand.vmem [shape: f32[1,16], index: 2, kind: input, shape index: {}]
  %s3 = inlined_call_operand.vmem [shape: bf16[16,8], index: 3, kind: input, shape index: {}]
  %s4 = inlined_call_operand.vmem [shape: f32[1,8], index: 4, kind: input, shape index: {}]
  %s5 = inlined_call_operand.vmem [shape: bf16[4,16,32], index: 5, kind: input, shape index: {}]
  %s6 = inlined_call_operand.vmem [shape: f32[1,32], index: 6, kind: input, shape index: {}]
  %s7 = inlined_call_operand.vmem [shape: bf16[32,16], index: 7, kind: input, shape index: {}]
  %s8 = inlined_call_operand.vmem [shape: f32[1,16], index: 8, kind: input, shape index: {}]
  %s9 = inlined_call_operand.vmem [shape: bf16[4,32,64], index: 9, kind: input, shape index: {}]
  %s10 = inlined_call_operand.vmem [shape: f32[1,64], index: 10, kind: input, shape index: {}]
  %s11 = inlined_call_operand.vmem [shape: bf16[64,32], index: 11, kind: input, shape index: {}]
  %s12 = inlined_call_operand.vmem [shape: f32[1,32], index: 12, kind: input, shape index: {}]
  %s13 = inlined_call_operand.vmem [shape: bf16[256,8], index: 13, kind: output, shape index: {0}]
  %s14 = inlined_call_operand.vmem [shape: bf16[64,16], index: 14, kind: output, shape index: {1}]
  %s15 = inlined_call_operand.vmem [shape: bf16[16,32], index: 15, kind: output, shape index: {2}]
  %16 = xla_tuple %s13, %s14, %s15
  %s17 = sld [smem:[#allocation0]]
  $region101: #{image_encoder_forward.1} parent=0
    _
  %s19 = ssub.s32 1, %s17
  %s20 = scalar_select 0, %s19, %s17
  loop: start=0, step=1, limit=4
  $region2: #{image_encoder_forward.1} parent=0 // loop_pre_header
    _
  $region3: #{image_encoder_forward.1} parent=0 // loop_header
    %s22 = sphi 0, %s26
    %p23 = scmp.ge.s32.totalorder %s22, 4
    %s32 = sphi 0, %s34
    %s35 = sphi 0, %s32
    %s36 = sphi 0, %s35
    %s52 = sphi 0, %s36
    %s56 = sphi 0, %s56
    %s58 = sphi 0, %s56
    %s59 = sphi 0, %s58
    %s73 = sphi 0, %s59
    %s77 = sphi 0, %s77
    %s79 = sphi 0, %s77
    %s80 = sphi 0, %s79
    %s94 = sphi 0, %s80
    %s98 = sphi 0, %s98
    %s100 = sphi 0, %s98
    %s101 = sphi 0, %s100
    %s115 = sphi 0, %s101
    %s119 = sphi 0, %s119
    %s121 = sphi 0, %s119
    %s122 = sphi 0, %s121
    %s136 = sphi 0, %s122
    %s140 = sphi 0, %s140
    %s142 = sphi 0, %s140
    %s143 = sphi 0, %s142
    %s157 = sphi 0, %s143
    %s161 = sphi 0, %s161
    %s163 = sphi 0, %s161
    %s164 = sphi 0, %s163
    %s178 = sphi 0, %s164
    %s182 = sphi 0, %s182
    %s184 = sphi 0, %s182
    %s185 = sphi 0, %s184
    %s199 = sphi 0, %s185
    %s203 = sphi 0, %s203
    %s205 = sphi 0, %s203
    %s206 = sphi 0, %s205
    %s220 = sphi 0, %s206
    %s224 = sphi 0, %s224
    %s226 = sphi 0, %s224
    %s227 = sphi 0, %s226
    %s241 = sphi 0, %s227
    %s245 = sphi 0, %s245
    %s247 = sphi 0, %s245
    %s248 = sphi 0, %s247
    %s262 = sphi 0, %s248
    %s266 = sphi 0, %s266
    %s268 = sphi 0, %s266
    %s269 = sphi 0, %s268
    %s283 = sphi 0, %s269
    %s287 = sphi 0, %s287
    %s289 = sphi 0, %s287
    %s290 = sphi 0, %s289
    %s304 = sphi 0, %s290
    %s310 = sphi 0, %s312
    %s313 = sphi 0, %s310
    %s314 = sphi 0, %s313
    %s330 = sphi 0, %s314
    %s336 = sphi 0, %s338
    %s339 = sphi 0, %s336
    %s340 = sphi 0, %s339
    %s356 = sphi 0, %s340
    %s362 = sphi 0, %s364
    %s365 = sphi 0, %s362
    %s366 = sphi 0, %s365
    %s382 = sphi 0, %s366
  $region4: #{image_encoder_forward.1} parent=0 // loop_header_branch
    %25 = sbr.rel (%p23) target = $region8
  $region5: #{image_encoder_forward.1} parent=0 // loop_body
    %s27 = ssub.s32 %s22, 1
    %s28 = ssub.s32 %s22, 2
    %s29 = sadd.s32 %s22, 1
    %s30 = ssub.s32 %s22, %s29
    %p31 = scmp.eq.s32.totalorder %s30, 0
    %s33 = sadd.s32 %s32, 1
    %s34 = scalar_select %p31, %s32, %s33
    %p37 = pneg %p31
    %p38 = scmp.eq.s32.totalorder %s22, 1
    %p39 = por %p37, %p38
    %p40 = scmp.ne.s32.totalorder %s32, %s35
    %p41 = scmp.eq.s32.totalorder %s22, 0
    %p42 = por %p40, %p41
    %p43 = scmp.ne.s32.totalorder %s32, %s35
    %p44 = scmp.eq.s32.totalorder %s27, 1
    %p45 = por %p43, %p44
    %p46 = scmp.ne.s32.totalorder %s35, %s36
    %p47 = scmp.eq.s32.totalorder %s27, 0
    %p48 = por %p46, %p47
    %p49 = scmp.ne.s32.totalorder %s35, %s36
    %p50 = scmp.eq.s32.totalorder %s28, 1
    %p51 = por %p49, %p50
    %p53 = scmp.ne.s32.totalorder %s36, %s52
    %p54 = scmp.eq.s32.totalorder %s28, 0
    %p55 = por %p53, %p54
    %s57 = sadd.s32 %s56, 1
    %p60 = scmp.eq.s32.totalorder %s22, 1
    %p61 = scmp.ne.s32.totalorder %s56, %s58
    %p62 = scmp.eq.s32.totalorder %s22, 0
    %p63 = por %p61, %p62
    %p64 = scmp.ne.s32.totalorder %s56, %s58
    %p65 = scmp.eq.s32.totalorder %s27, 1
    %p66 = por %p64, %p65
    %p67 = scmp.ne.s32.totalorder %s58, %s59
    %p68 = scmp.eq.s32.totalorder %s27, 0
    %p69 = por %p67, %p68
    %p70 = scmp.ne.s32.totalorder %s58, %s59
    %p71 = scmp.eq.s32.totalorder %s28, 1
    %p72 = por %p70, %p71
    %p74 = scmp.ne.s32.totalorder %s59, %s73
    %p75 = scmp.eq.s32.totalorder %s28, 0
    %p76 = por %p74, %p75
    %s78 = sadd.s32 %s77, 1
    %p81 = scmp.eq.s32.totalorder %s22, 1
    %p82 = scmp.ne.s32.totalorder %s77, %s79
    %p83 = scmp.eq.s32.totalorder %s22, 0
    %p84 = por %p82, %p83
    %p85 = scmp.ne.s32.totalorder %s77, %s79
    %p86 = scmp.eq.s32.totalorder %s27, 1
    %p87 = por %p85, %p86
    %p88 = scmp.ne.s32.totalorder %s79, %s80
    %p89 = scmp.eq.s32.totalorder %s27, 0
    %p90 = por %p88, %p89
    %p91 = scmp.ne.s32.totalorder %s79, %s80
    %p92 = scmp.eq.s32.totalorder %s28, 1
    %p93 = por %p91, %p92
    %p95 = scmp.ne.s32.totalorder %s80, %s94
    %p96 = scmp.eq.s32.totalorder %s28, 0
    %p97 = por %p95, %p96
    %s99 = sadd.s32 %s98, 1
    %p102 = scmp.eq.s32.totalorder %s22, 1
    %p103 = scmp.ne.s32.totalorder %s98, %s100
    %p104 = scmp.eq.s32.totalorder %s22, 0
    %p105 = por %p103, %p104
    %p106 = scmp.ne.s32.totalorder %s98, %s100
    %p107 = scmp.eq.s32.totalorder %s27, 1
    %p108 = por %p106, %p107
    %p109 = scmp.ne.s32.totalorder %s100, %s101
    %p110 = scmp.eq.s32.totalorder %s27, 0
    %p111 = por %p109, %p110
    %p112 = scmp.ne.s32.totalorder %s100, %s101
    %p113 = scmp.eq.s32.totalorder %s28, 1
    %p114 = por %p112, %p113
    %p116 = scmp.ne.s32.totalorder %s101, %s115
    %p117 = scmp.eq.s32.totalorder %s28, 0
    %p118 = por %p116, %p117
    %s120 = sadd.s32 %s119, 1
    %p123 = scmp.eq.s32.totalorder %s22, 1
    %p124 = scmp.ne.s32.totalorder %s119, %s121
    %p125 = scmp.eq.s32.totalorder %s22, 0
    %p126 = por %p124, %p125
    %p127 = scmp.ne.s32.totalorder %s119, %s121
    %p128 = scmp.eq.s32.totalorder %s27, 1
    %p129 = por %p127, %p128
    %p130 = scmp.ne.s32.totalorder %s121, %s122
    %p131 = scmp.eq.s32.totalorder %s27, 0
    %p132 = por %p130, %p131
    %p133 = scmp.ne.s32.totalorder %s121, %s122
    %p134 = scmp.eq.s32.totalorder %s28, 1
    %p135 = por %p133, %p134
    %p137 = scmp.ne.s32.totalorder %s122, %s136
    %p138 = scmp.eq.s32.totalorder %s28, 0
    %p139 = por %p137, %p138
    %s141 = sadd.s32 %s140, 1
    %p144 = scmp.eq.s32.totalorder %s22, 1
    %p145 = scmp.ne.s32.totalorder %s140, %s142
    %p146 = scmp.eq.s32.totalorder %s22, 0
    %p147 = por %p145, %p146
    %p148 = scmp.ne.s32.totalorder %s140, %s142
    %p149 = scmp.eq.s32.totalorder %s27, 1
    %p150 = por %p148, %p149
    %p151 = scmp.ne.s32.totalorder %s142, %s143
    %p152 = scmp.eq.s32.totalorder %s27, 0
    %p153 = por %p151, %p152
    %p154 = scmp.ne.s32.totalorder %s142, %s143
    %p155 = scmp.eq.s32.totalorder %s28, 1
    %p156 = por %p154, %p155
    %p158 = scmp.ne.s32.totalorder %s143, %s157
    %p159 = scmp.eq.s32.totalorder %s28, 0
    %p160 = por %p158, %p159
    %s162 = sadd.s32 %s161, 1
    %p165 = scmp.eq.s32.totalorder %s22, 1
    %p166 = scmp.ne.s32.totalorder %s161, %s163
    %p167 = scmp.eq.s32.totalorder %s22, 0
    %p168 = por %p166, %p167
    %p169 = scmp.ne.s32.totalorder %s161, %s163
    %p170 = scmp.eq.s32.totalorder %s27, 1
    %p171 = por %p169, %p170
    %p172 = scmp.ne.s32.totalorder %s163, %s164
    %p173 = scmp.eq.s32.totalorder %s27, 0
    %p174 = por %p172, %p173
    %p175 = scmp.ne.s32.totalorder %s163, %s164
    %p176 = scmp.eq.s32.totalorder %s28, 1
    %p177 = por %p175, %p176
    %p179 = scmp.ne.s32.totalorder %s164, %s178
    %p180 = scmp.eq.s32.totalorder %s28, 0
    %p181 = por %p179, %p180
    %s183 = sadd.s32 %s182, 1
    %p186 = scmp.eq.s32.totalorder %s22, 1
    %p187 = scmp.ne.s32.totalorder %s182, %s184
    %p188 = scmp.eq.s32.totalorder %s22, 0
    %p189 = por %p187, %p188
    %p190 = scmp.ne.s32.totalorder %s182, %s184
    %p191 = scmp.eq.s32.totalorder %s27, 1
    %p192 = por %p190, %p191
    %p193 = scmp.ne.s32.totalorder %s184, %s185
    %p194 = scmp.eq.s32.totalorder %s27, 0
    %p195 = por %p193, %p194
    %p196 = scmp.ne.s32.totalorder %s184, %s185
    %p197 = scmp.eq.s32.totalorder %s28, 1
    %p198 = por %p196, %p197
    %p200 = scmp.ne.s32.totalorder %s185, %s199
    %p201 = scmp.eq.s32.totalorder %s28, 0
    %p202 = por %p200, %p201
    %s204 = sadd.s32 %s203, 1
    %p207 = scmp.eq.s32.totalorder %s22, 1
    %p208 = scmp.ne.s32.totalorder %s203, %s205
    %p209 = scmp.eq.s32.totalorder %s22, 0
    %p210 = por %p208, %p209
    %p211 = scmp.ne.s32.totalorder %s203, %s205
    %p212 = scmp.eq.s32.totalorder %s27, 1
    %p213 = por %p211, %p212
    %p214 = scmp.ne.s32.totalorder %s205, %s206
    %p215 = scmp.eq.s32.totalorder %s27, 0
    %p216 = por %p214, %p215
    %p217 = scmp.ne.s32.totalorder %s205, %s206
    %p218 = scmp.eq.s32.totalorder %s28, 1
    %p219 = por %p217, %p218
    %p221 = scmp.ne.s32.totalorder %s206, %s220
    %p222 = scmp.eq.s32.totalorder %s28, 0
    %p223 = por %p221, %p222
    %s225 = sadd.s32 %s224, 1
    %p228 = scmp.eq.s32.totalorder %s22, 1
    %p229 = scmp.ne.s32.totalorder %s224, %s226
    %p230 = scmp.eq.s32.totalorder %s22, 0
    %p231 = por %p229, %p230
    %p232 = scmp.ne.s32.totalorder %s224, %s226
    %p233 = scmp.eq.s32.totalorder %s27, 1
    %p234 = por %p232, %p233
    %p235 = scmp.ne.s32.totalorder %s226, %s227
    %p236 = scmp.eq.s32.totalorder %s27, 0
    %p237 = por %p235, %p236
    %p238 = scmp.ne.s32.totalorder %s226, %s227
    %p239 = scmp.eq.s32.totalorder %s28, 1
    %p240 = por %p238, %p239
    %p242 = scmp.ne.s32.totalorder %s227, %s241
    %p243 = scmp.eq.s32.totalorder %s28, 0
    %p244 = por %p242, %p243
    %s246 = sadd.s32 %s245, 1
    %p249 = scmp.eq.s32.totalorder %s22, 1
    %p250 = scmp.ne.s32.totalorder %s245, %s247
    %p251 = scmp.eq.s32.totalorder %s22, 0
    %p252 = por %p250, %p251
    %p253 = scmp.ne.s32.totalorder %s245, %s247
    %p254 = scmp.eq.s32.totalorder %s27, 1
    %p255 = por %p253, %p254
    %p256 = scmp.ne.s32.totalorder %s247, %s248
    %p257 = scmp.eq.s32.totalorder %s27, 0
    %p258 = por %p256, %p257
    %p259 = scmp.ne.s32.totalorder %s247, %s248
    %p260 = scmp.eq.s32.totalorder %s28, 1
    %p261 = por %p259, %p260
    %p263 = scmp.ne.s32.totalorder %s248, %s262
    %p264 = scmp.eq.s32.totalorder %s28, 0
    %p265 = por %p263, %p264
    %s267 = sadd.s32 %s266, 1
    %p270 = scmp.eq.s32.totalorder %s22, 1
    %p271 = scmp.ne.s32.totalorder %s266, %s268
    %p272 = scmp.eq.s32.totalorder %s22, 0
    %p273 = por %p271, %p272
    %p274 = scmp.ne.s32.totalorder %s266, %s268
    %p275 = scmp.eq.s32.totalorder %s27, 1
    %p276 = por %p274, %p275
    %p277 = scmp.ne.s32.totalorder %s268, %s269
    %p278 = scmp.eq.s32.totalorder %s27, 0
    %p279 = por %p277, %p278
    %p280 = scmp.ne.s32.totalorder %s268, %s269
    %p281 = scmp.eq.s32.totalorder %s28, 1
    %p282 = por %p280, %p281
    %p284 = scmp.ne.s32.totalorder %s269, %s283
    %p285 = scmp.eq.s32.totalorder %s28, 0
    %p286 = por %p284, %p285
    %s288 = sadd.s32 %s287, 1
    %p291 = scmp.eq.s32.totalorder %s22, 1
    %p292 = scmp.ne.s32.totalorder %s287, %s289
    %p293 = scmp.eq.s32.totalorder %s22, 0
    %p294 = por %p292, %p293
    %p295 = scmp.ne.s32.totalorder %s287, %s289
    %p296 = scmp.eq.s32.totalorder %s27, 1
    %p297 = por %p295, %p296
    %p298 = scmp.ne.s32.totalorder %s289, %s290
    %p299 = scmp.eq.s32.totalorder %s27, 0
    %p300 = por %p298, %p299
    %p301 = scmp.ne.s32.totalorder %s289, %s290
    %p302 = scmp.eq.s32.totalorder %s28, 1
    %p303 = por %p301, %p302
    %p305 = scmp.ne.s32.totalorder %s290, %s304
    %p306 = scmp.eq.s32.totalorder %s28, 0
    %p307 = por %p305, %p306
    %s308 = ssub.s32 %s22, %s29
    %p309 = scmp.eq.s32.totalorder %s308, 0
    %s311 = sadd.s32 %s310, 1
    %s312 = scalar_select %p309, %s310, %s311
    %p315 = pneg %p309
    %p316 = scmp.eq.s32.totalorder %s22, 1
    %p317 = por %p315, %p316
    %p318 = scmp.ne.s32.totalorder %s310, %s313
    %p319 = scmp.eq.s32.totalorder %s22, 0
    %p320 = por %p318, %p319
    %p321 = scmp.ne.s32.totalorder %s310, %s313
    %p322 = scmp.eq.s32.totalorder %s27, 1
    %p323 = por %p321, %p322
    %p324 = scmp.ne.s32.totalorder %s313, %s314
    %p325 = scmp.eq.s32.totalorder %s27, 0
    %p326 = por %p324, %p325
    %p327 = scmp.ne.s32.totalorder %s313, %s314
    %p328 = scmp.eq.s32.totalorder %s28, 1
    %p329 = por %p327, %p328
    %p331 = scmp.ne.s32.totalorder %s314, %s330
    %p332 = scmp.eq.s32.totalorder %s28, 0
    %p333 = por %p331, %p332
    %s334 = ssub.s32 %s22, %s29
    %p335 = scmp.eq.s32.totalorder %s334, 0
    %s337 = sadd.s32 %s336, 1
    %s338 = scalar_select %p335, %s336, %s337
    %p341 = pneg %p335
    %p342 = scmp.eq.s32.totalorder %s22, 1
    %p343 = por %p341, %p342
    %p344 = scmp.ne.s32.totalorder %s336, %s339
    %p345 = scmp.eq.s32.totalorder %s22, 0
    %p346 = por %p344, %p345
    %p347 = scmp.ne.s32.totalorder %s336, %s339
    %p348 = scmp.eq.s32.totalorder %s27, 1
    %p349 = por %p347, %p348
    %p350 = scmp.ne.s32.totalorder %s339, %s340
    %p351 = scmp.eq.s32.totalorder %s27, 0
    %p352 = por %p350, %p351
    %p353 = scmp.ne.s32.totalorder %s339, %s340
    %p354 = scmp.eq.s32.totalorder %s28, 1
    %p355 = por %p353, %p354
    %p357 = scmp.ne.s32.totalorder %s340, %s356
    %p358 = scmp.eq.s32.totalorder %s28, 0
    %p359 = por %p357, %p358
    %s360 = ssub.s32 %s22, %s29
    %p361 = scmp.eq.s32.totalorder %s360, 0
    %s363 = sadd.s32 %s362, 1
    %s364 = scalar_select %p361, %s362, %s363
    %p367 = pneg %p361
    %p368 = scmp.eq.s32.totalorder %s22, 1
    %p369 = por %p367, %p368
    %p370 = scmp.ne.s32.totalorder %s362, %s365
    %p371 = scmp.eq.s32.totalorder %s22, 0
    %p372 = por %p370, %p371
    %p373 = scmp.ne.s32.totalorder %s362, %s365
    %p374 = scmp.eq.s32.totalorder %s27, 1
    %p375 = por %p373, %p374
    %p376 = scmp.ne.s32.totalorder %s365, %s366
    %p377 = scmp.eq.s32.totalorder %s27, 0
    %p378 = por %p376, %p377
    %p379 = scmp.ne.s32.totalorder %s365, %s366
    %p380 = scmp.eq.s32.totalorder %s28, 1
    %p381 = por %p379, %p380
    %p383 = scmp.ne.s32.totalorder %s366, %s382
    %p384 = scmp.eq.s32.totalorder %s28, 0
    %p385 = por %p383, %p384
    %p386 = scmp.le.s32.totalorder 1, %s22
    %p387 = scmp.lt.s32.totalorder %s22, 3
    %p388 = pnand %p386, %p387
    %p389 = pneg %p388
    // Predicated region
    $region9: #{image_encoder_forward.1} parent=5 // pred_check
      _
    $region10: #{image_encoder_forward.1} parent=5 // pred_check_branch
      %391 = sbr.rel (%p388) target = $region12
    $region11: #{image_encoder_forward.1} parent=5 // pred_region
      %s392 = ssub.s32 %s22, 1
      // Predicated region
      $region13: #{image_encoder_forward.1} parent=11 // pred_check
        %p393 = pneg %p69
      $region14: #{image_encoder_forward.1} parent=11 // pred_check_branch
        %395 = sbr.rel (%p393) target = $region16
      $region15: #{image_encoder_forward.1} parent=11 // pred_region
        _
      $region16: #{image_encoder_forward.1} parent=11 // pred_fallthru
        _
      // Predicated region
      $region17: #{image_encoder_forward.1} parent=11 // pred_check
        %p396 = pneg %p90
      $region18: #{image_encoder_forward.1} parent=11 // pred_check_branch
        %398 = sbr.rel (%p396) target = $region20
      $region19: #{image_encoder_forward.1} parent=11 // pred_region
        _
      $region20: #{image_encoder_forward.1} parent=11 // pred_fallthru
        _
      // Predicated region
      $region21: #{image_encoder_forward.1} parent=11 // pred_check
        %p399 = pneg %p111
      $region22: #{image_encoder_forward.1} parent=11 // pred_check_branch
        %401 = sbr.rel (%p399) target = $region24
      $region23: #{image_encoder_forward.1} parent=11 // pred_region
        _
      $region24: #{image_encoder_forward.1} parent=11 // pred_fallthru
        _
      // Predicated region
      $region25: #{image_encoder_forward.1} parent=11 // pred_check
        %p402 = pneg %p132
      $region26: #{image_encoder_forward.1} parent=11 // pred_check_branch
        %404 = sbr.rel (%p402) target = $region28
      $region27: #{image_encoder_forward.1} parent=11 // pred_region
        _
      $region28: #{image_encoder_forward.1} parent=11 // pred_fallthru
        _
      // Predicated region
      $region29: #{image_encoder_forward.1} parent=11 // pred_check
        %p405 = pneg %p153
      $region30: #{image_encoder_forward.1} parent=11 // pred_check_branch
        %407 = sbr.rel (%p405) target = $region32
      $region31: #{image_encoder_forward.1} parent=11 // pred_region
        _
      $region32: #{image_encoder_forward.1} parent=11 // pred_fallthru
        _
      // Predicated region
      $region33: #{image_encoder_forward.1} parent=11 // pred_check
        %p408 = pneg %p174
      $region34: #{image_encoder_forward.1} parent=11 // pred_check_branch
        %410 = sbr.rel (%p408) target = $region36
      $region35: #{image_encoder_forward.1} parent=11 // pred_region
        _
      $region36: #{image_encoder_forward.1} parent=11 // pred_fallthru
        _
      // Predicated region
      $region37: #{image_encoder_forward.1} parent=11 // pred_check
        %p411 = pneg %p195
      $region38: #{image_encoder_forward.1} parent=11 // pred_check_branch
        %413 = sbr.rel (%p411) target = $region40
      $region39: #{image_encoder_forward.1} parent=11 // pred_region
        _
      $region40: #{image_encoder_forward.1} parent=11 // pred_fallthru
        _
      // Predicated region
      $region41: #{image_encoder_forward.1} parent=11 // pred_check
        %p414 = pneg %p216
      $region42: #{image_encoder_forward.1} parent=11 // pred_check_branch
        %416 = sbr.rel (%p414) target = $region44
      $region43: #{image_encoder_forward.1} parent=11 // pred_region
        _
      $region44: #{image_encoder_forward.1} parent=11 // pred_fallthru
        _
      // Predicated region
      $region45: #{image_encoder_forward.1} parent=11 // pred_check
        %p417 = pneg %p237
      $region46: #{image_encoder_forward.1} parent=11 // pred_check_branch
        %419 = sbr.rel (%p417) target = $region48
      $region47: #{image_encoder_forward.1} parent=11 // pred_region
        _
      $region48: #{image_encoder_forward.1} parent=11 // pred_fallthru
        _
      // Predicated region
      $region49: #{image_encoder_forward.1} parent=11 // pred_check
        %p420 = pneg %p258
      $region50: #{image_encoder_forward.1} parent=11 // pred_check_branch
        %422 = sbr.rel (%p420) target = $region52
      $region51: #{image_encoder_forward.1} parent=11 // pred_region
        _
      $region52: #{image_encoder_forward.1} parent=11 // pred_fallthru
        _
      // Predicated region
      $region53: #{image_encoder_forward.1} parent=11 // pred_check
        %p423 = pneg %p279
      $region54: #{image_encoder_forward.1} parent=11 // pred_check_branch
        %425 = sbr.rel (%p423) target = $region56
      $region55: #{image_encoder_forward.1} parent=11 // pred_region
        _
      $region56: #{image_encoder_forward.1} parent=11 // pred_fallthru
        _
      // Predicated region
      $region57: #{image_encoder_forward.1} parent=11 // pred_check
        %p426 = pneg %p300
      $region58: #{image_encoder_forward.1} parent=11 // pred_check_branch
        %428 = sbr.rel (%p426) target = $region60
      $region59: #{image_encoder_forward.1} parent=11 // pred_region
        _
      $region60: #{image_encoder_forward.1} parent=11 // pred_fallthru
        _
    $region12: #{image_encoder_forward.1} parent=5 // pred_fallthru
      _
    %p429 = scmp.lt.s32.totalorder %s22, 2
    // Predicated region
    $region61: #{image_encoder_forward.1} parent=5 // pred_check
      %p430 = pneg %p429
    $region62: #{image_encoder_forward.1} parent=5 // pred_check_branch
      %432 = sbr.rel (%p430) target = $region64
    $region63: #{image_encoder_forward.1} parent=5 // pred_region
      // Predicated region
      $region65: #{image_encoder_forward.1} parent=63 // pred_check
        %p433 = pneg %p42
      $region66: #{image_encoder_forward.1} parent=63 // pred_check_branch
        %435 = sbr.rel (%p433) target = $region68
      $region67: #{image_encoder_forward.1} parent=63 // pred_region
        %s436 = smul.u32 16, %s22
        %p437 = scmp.lt.s32.totalorder %s436, 31
        %s438 = scalar_select %p437, %s436, 31
        %s439 = smul.addr %s438, 4
        %s440 = scalar_lea.vmem %s0, %s439
        %s441 = smul.u32 16, %s22
      $region68: #{image_encoder_forward.1} parent=63 // pred_fallthru
        _
    $region64: #{image_encoder_forward.1} parent=5 // pred_fallthru
      _
    %p442 = scmp.le.s32.totalorder 1, %s22
    %p443 = scmp.lt.s32.totalorder %s22, 3
    %p444 = pnand %p442, %p443
    %p445 = pneg %p444
    // Predicated region
    $region69: #{image_encoder_forward.1} parent=5 // pred_check
      _
    $region70: #{image_encoder_forward.1} parent=5 // pred_check_branch
      %447 = sbr.rel (%p444) target = $region72
    $region71: #{image_encoder_forward.1} parent=5 // pred_region
      %s448 = ssub.s32 %s22, 1
      %s449 = smul.u32 16, %s27
      %p450 = scmp.lt.s32.totalorder %s449, 31
      %s451 = scalar_select %p450, %s449, 31
      %s452 = smul.addr %s451, 4
      %s453 = scalar_lea.vmem %s0, %s452
      %p454 = pneg %p48
      %p455 = pneg %p45
      %p456 = pneg %p69
      %p457 = pneg %p66
      %p458 = pneg %p90
      %p459 = pneg %p87
      %p460 = pneg %p111
      %p461 = pneg %p108
      %p462 = pneg %p132
      %p463 = pneg %p129
      %p464 = pneg %p153
      %p465 = pneg %p150
      %p466 = pneg %p174
      %p467 = pneg %p171
      %p468 = pneg %p195
      %p469 = pneg %p192
      %p470 = pneg %p216
      %p471 = pneg %p213
      %p472 = pneg %p237
      %p473 = pneg %p234
      %p474 = pneg %p258
      %p475 = pneg %p255
      %p476 = pneg %p279
      %p477 = pneg %p276
      %p478 = pneg %p300
      %p479 = pneg %p297
      %p480 = pneg %p326
      %p481 = pneg %p323
      %s482 = smul.u32 16, %s27
      %p483 = scmp.lt.s32.totalorder %s482, 31
      %s484 = scalar_select %p483, %s482, 31
      %s485 = smul.addr %s484, 4
      %s486 = scalar_lea.vmem %s13, %s485
      %p487 = pneg %p352
      %p488 = pneg %p349
      %s489 = smul.u32 4, %s27
      %p490 = scmp.lt.s32.totalorder %s489, 7
      %s491 = scalar_select %p490, %s489, 7
      %s492 = smul.addr %s491, 4
      %s493 = scalar_lea.vmem %s14, %s492
      %p494 = pneg %p378
      %p495 = pneg %p375
      %p496 = scmp.lt.s32.totalorder %s27, 1
      %s497 = scalar_select %p496, %s27, 1
      %s498 = smul.addr %s497, 4
      %s499 = scalar_lea.vmem %s15, %s498
      %s500 = smul.u32 16, %s27
      %p501 = scmp.lt.s32.totalorder %s500, 31
      %s502 = scalar_select %p501, %s500, 31
      %s503 = smul.addr %s502, 4
      %s504 = scalar_lea.vmem %s0, %s503
      %s505 = smul.u32 16, %s27
      %s506 = smul.u32 16, %s27
      %p507 = scmp.lt.s32.totalorder %s506, 31
      %s508 = scalar_select %p507, %s506, 31
      %s509 = smul.addr %s508, 4
      %s510 = scalar_lea.vmem %s13, %s509
      %s511 = smul.u32 16, %s27
      %s512 = smul.u32 4, %s27
      %p513 = scmp.lt.s32.totalorder %s512, 7
      %s514 = scalar_select %p513, %s512, 7
      %s515 = smul.addr %s514, 4
      %s516 = scalar_lea.vmem %s14, %s515
      %s517 = smul.u32 4, %s27
      %p518 = scmp.lt.s32.totalorder %s27, 1
      %s519 = scalar_select %p518, %s27, 1
      %s520 = smul.addr %s519, 4
      %s521 = scalar_lea.vmem %s15, %s520
      %v523 = vld [vmem:[%s504] sm:$0xf]
      %v524 = vld [vmem:[%s504 + $0x4] sm:$0xf]
      %v525 = vld [vmem:[%s504 + $0x8] sm:$0xf]
      %v526 = vld [vmem:[%s504 + $0xc] sm:$0xf]
      %v527 = vld [vmem:[%s504 + $0x10] sm:$0xf]
      %v528 = vld [vmem:[%s504 + $0x14] sm:$0xf]
      %v529 = vld [vmem:[%s504 + $0x18] sm:$0xf]
      %v530 = vld [vmem:[%s504 + $0x1c] sm:$0xf]
      %v531 = vld [vmem:[%s504 + $0x20] sm:$0xf]
      %v532 = vld [vmem:[%s504 + $0x24] sm:$0xf]
      %v533 = vld [vmem:[%s504 + $0x28] sm:$0xf]
      %v534 = vld [vmem:[%s504 + $0x2c] sm:$0xf]
      %v535 = vld [vmem:[%s504 + $0x30] sm:$0xf]
      %v536 = vld [vmem:[%s504 + $0x34] sm:$0xf]
      %v537 = vld [vmem:[%s504 + $0x38] sm:$0xf]
      %v538 = vld [vmem:[%s504 + $0x3c] sm:$0xf]
      %v539 = vld [vmem:[%s1] sm:$0xf]
      %v540 = vld [vmem:[%s1 + $0x4] sm:$0xf]
      %v541 = vld [vmem:[%s1 + $0x8] sm:$0xf]
      %v542 = vld [vmem:[%s1 + $0xc] sm:$0xf]
      %v543 = vld [vmem:[%s1 + $0x10] sm:$0xf]
      %v544 = vld [vmem:[%s1 + $0x14] sm:$0xf]
      %v545 = vld [vmem:[%s2] sm:$0x1]
      %v547 = vlaneseq
      %v548 = vshrl.u32 %v547, 7
      %v549 = vsub.s32 0, %v548
      %v550 = vrot.slane %v545, %v549
      %v568 = vunpack.c.l.b16 %v523
      %v569 = vunpack.c.l.b16 %v524
      %v570 = vunpack.c.l.b16 %v525
      %v571 = vunpack.c.l.b16 %v526
      %v572 = vunpack.c.l.b16 %v527
      %v573 = vunpack.c.l.b16 %v528
      %v574 = vunpack.c.l.b16 %v529
      %v575 = vunpack.c.l.b16 %v530
      %v576 = vunpack.c.l.b16 %v531
      %v577 = vunpack.c.l.b16 %v532
      %v578 = vunpack.c.l.b16 %v533
      %v579 = vunpack.c.l.b16 %v534
      %v580 = vunpack.c.l.b16 %v535
      %v581 = vunpack.c.l.b16 %v536
      %v582 = vunpack.c.l.b16 %v537
      %v583 = vunpack.c.l.b16 %v538
      %v584 = vpack.c.b16 %v569, %v568
      %v585 = vpack.c.b16 %v571, %v570
      %v586 = vpack.c.b16 %v573, %v572
      %v587 = vpack.c.b16 %v575, %v574
      %v588 = vpack.c.b16 %v577, %v576
      %v589 = vpack.c.b16 %v579, %v578
      %v590 = vpack.c.b16 %v581, %v580
      %v591 = vpack.c.b16 %v583, %v582
      %v598 = vunpack.c.l.b16 %v539
      %v599 = vunpack.c.l.b16 %v540
      %v600 = vunpack.c.l.b16 %v541
      %v601 = vunpack.c.l.b16 %v542
      %v602 = vunpack.c.l.b16 %v543
      %v603 = vunpack.c.l.b16 %v544
      %v604 = vpack.c.b16 %v599, %v598
      %v605 = vpack.c.b16 %v601, %v600
      %v606 = vpack.c.b16 %v603, %v602
      %vm610 = vcmask 392192
      %v612 = vsel %vm610, %v584, 0
      %v615 = vsel %vm610, %v585, 0
      %v618 = vsel %vm610, %v586, 0
      %v621 = vsel %vm610, %v587, 0
      %v624 = vsel %vm610, %v588, 0
      %v627 = vsel %vm610, %v589, 0
      %v630 = vsel %vm610, %v590, 0
      %v633 = vsel %vm610, %v591, 0
      %635 = vmatprep.subr.bf16.mxu0 0
      %636 = vmatpush1.bf16.msra.mxu0 %v604
      %637 = vmatprep.subr.bf16.mxu0 0
      %638 = vmatpush1.bf16.msra.mxu0 %v605
      %639 = vmatprep.subr.bf16.mxu0 0
      %640 = vmatpush1.bf16.msra.mxu0 %v606
      %641 = vmatprep.subr.bf16.mxu0 0
      %642 = vmatpush1.bf16.msra.mxu0 0
      %643 = vmatprep.subr.bf16.mxu0 0
      %644 = vmatpush1.bf16.msra.mxu0 0
      %645 = vmatprep.subr.bf16.mxu0 0
      %646 = vmatpush1.bf16.msra.mxu0 0
      %647 = vmatprep.subr.bf16.mxu0 0
      %648 = vmatpush1.bf16.msra.mxu0 0
      %649 = vmatprep.subr.bf16.mxu0 0
      %650 = vmatpush1.bf16.msra.mxu0 0
      %651 = vmatprep.subr.bf16.mxu0 0
      %652 = vmatpush1.bf16.msra.mxu0 0
      %653 = vmatprep.subr.bf16.mxu0 0
      %654 = vmatpush1.bf16.msra.mxu0 0
      %655 = vmatprep.subr.bf16.mxu0 0
      %656 = vmatpush1.bf16.msra.mxu0 0
      %657 = vmatprep.subr.bf16.mxu0 0
      %658 = vmatpush1.bf16.msra.mxu0 0
      %659 = vmatprep.subr.bf16.mxu0 0
      %660 = vmatpush1.bf16.msra.mxu0 0
      %661 = vmatprep.subr.bf16.mxu0 0
      %662 = vmatpush1.bf16.msra.mxu0 0
      %663 = vmatprep.subr.bf16.mxu0 0
      %664 = vmatpush1.bf16.msra.mxu0 0
      %665 = vmatprep.subr.bf16.mxu0 0
      %666 = vmatpush1.bf16.msra.mxu0 0
      %667 = vmatprep.mubr.bf16.mxu0 0
      %668 = vmatmul.mubr.bf16.gmra.mrb[0].mxu0 %v612
      %v669 = vpop.f32.mrb[0].mxu0
      %v670 = vadd.f32 %v550, %v669
      %v671 = vpop.f32.mrb[0].mxu0
      %v672 = vpop.f32.mrb[0].mxu0
      %v673 = vadd.f32 %v550, %v672
      %v674 = vpop.f32.mrb[0].mxu0
      %675 = vmatprep.mubr.bf16.mxu0 0
      %676 = vmatmul.mubr.bf16.gmra.mrb[0].mxu0 %v615
      %v677 = vpop.f32.mrb[0].mxu0
      %v678 = vadd.f32 %v550, %v677
      %v679 = vpop.f32.mrb[0].mxu0
      %v680 = vpop.f32.mrb[0].mxu0
      %v681 = vadd.f32 %v550, %v680
      %v682 = vpop.f32.mrb[0].mxu0
      %683 = vmatprep.mubr.bf16.mxu0 0
      %684 = vmatmul.mubr.bf16.gmra.mrb[0].mxu0 %v618
      %v685 = vpop.f32.mrb[0].mxu0
      %v686 = vadd.f32 %v550, %v685
      %v687 = vpop.f32.mrb[0].mxu0
      %v688 = vpop.f32.mrb[0].mxu0
      %v689 = vadd.f32 %v550, %v688
      %v690 = vpop.f32.mrb[0].mxu0
      %691 = vmatprep.mubr.bf16.mxu0 0
      %692 = vmatmul.mubr.bf16.gmra.mrb[0].mxu0 %v621
      %v693 = vpop.f32.mrb[0].mxu0
      %v694 = vadd.f32 %v550, %v693
      %v695 = vpop.f32.mrb[0].mxu0
      %v696 = vpop.f32.mrb[0].mxu0
      %v697 = vadd.f32 %v550, %v696
      %v698 = vpop.f32.mrb[0].mxu0
      %699 = vmatprep.mubr.bf16.mxu0 0
      %700 = vmatmul.mubr.bf16.gmra.mrb[0].mxu0 %v624
      %v701 = vpop.f32.mrb[0].mxu0
      %v702 = vadd.f32 %v550, %v701
      %v703 = vpop.f32.mrb[0].mxu0
      %v704 = vpop.f32.mrb[0].mxu0
      %v705 = vadd.f32 %v550, %v704
      %v706 = vpop.f32.mrb[0].mxu0
      %707 = vmatprep.mubr.bf16.mxu0 0
      %708 = vmatmul.mubr.bf16.gmra.mrb[0].mxu0 %v627
      %v709 = vpop.f32.mrb[0].mxu0
      %v710 = vadd.f32 %v550, %v709
      %v711 = vpop.f32.mrb[0].mxu0
      %v712 = vpop.f32.mrb[0].mxu0
      %v713 = vadd.f32 %v550, %v712
      %v714 = vpop.f32.mrb[0].mxu0
      %715 = vmatprep.mubr.bf16.mxu0 0
      %716 = vmatmul.mubr.bf16.gmra.mrb[0].mxu0 %v630
      %v717 = vpop.f32.mrb[0].mxu0
      %v718 = vadd.f32 %v550, %v717
      %v719 = vpop.f32.mrb[0].mxu0
      %v720 = vpop.f32.mrb[0].mxu0
      %v721 = vadd.f32 %v550, %v720
      %v722 = vpop.f32.mrb[0].mxu0
      %723 = vmatprep.mubr.bf16.mxu0 0
      %724 = vmatmul.mubr.bf16.gmra.mrb[0].mxu0 %v633
      %v725 = vpop.f32.mrb[0].mxu0
      %v726 = vadd.f32 %v550, %v725
      %v727 = vpop.f32.mrb[0].mxu0
      %v728 = vpop.f32.mrb[0].mxu0
      %v729 = vadd.f32 %v550, %v728
      %v730 = vpop.f32.mrb[0].mxu0
      %731 = vdwg.mxu0
      %v732 = vmul.f32 %v670, %v670
      %v733 = vmul.f32 %v673, %v673
      %v734 = vmul.f32 %v678, %v678
      %v735 = vmul.f32 %v681, %v681
      %v736 = vmul.f32 %v686, %v686
      %v737 = vmul.f32 %v689, %v689
      %v738 = vmul.f32 %v694, %v694
      %v739 = vmul.f32 %v697, %v697
      %v740 = vmul.f32 %v702, %v702
      %v741 = vmul.f32 %v705, %v705
      %v742 = vmul.f32 %v710, %v710
      %v743 = vmul.f32 %v713, %v713
      %v744 = vmul.f32 %v718, %v718
      %v745 = vmul.f32 %v721, %v721
      %v746 = vmul.f32 %v726, %v726
      %v747 = vmul.f32 %v729, %v729
      %v748 = vmul.f32 %v670, %v732
      %v749 = vmul.f32 %v673, %v733
      %v750 = vmul.f32 %v678, %v734
      %v751 = vmul.f32 %v681, %v735
      %v752 = vmul.f32 %v686, %v736
      %v753 = vmul.f32 %v689, %v737
      %v754 = vmul.f32 %v694, %v738
      %v755 = vmul.f32 %v697, %v739
      %v756 = vmul.f32 %v702, %v740
      %v757 = vmul.f32 %v705, %v741
      %v758 = vmul.f32 %v710, %v742
      %v759 = vmul.f32 %v713, %v743
      %v760 = vmul.f32 %v718, %v744
      %v761 = vmul.f32 %v721, %v745
      %v762 = vmul.f32 %v726, %v746
      %v763 = vmul.f32 %v729, %v747
      %v764 = vmul.f32 %v748, 0.044715
      %v765 = vmul.f32 %v749, 0.044715
      %v766 = vmul.f32 %v750, 0.044715
      %v767 = vmul.f32 %v751, 0.044715
      %v768 = vmul.f32 %v752, 0.044715
      %v769 = vmul.f32 %v753, 0.044715
      %v770 = vmul.f32 %v754, 0.044715
      %v771 = vmul.f32 %v755, 0.044715
      %v772 = vmul.f32 %v756, 0.044715
      %v773 = vmul.f32 %v757, 0.044715
      %v774 = vmul.f32 %v758, 0.044715
      %v775 = vmul.f32 %v759, 0.044715
      %v776 = vmul.f32 %v760, 0.044715
      %v777 = vmul.f32 %v761, 0.044715
      %v778 = vmul.f32 %v762, 0.044715
      %v779 = vmul.f32 %v763, 0.044715
      %v780 = vadd.f32 %v670, %v764
      %v781 = vadd.f32 %v673, %v765
      %v782 = vadd.f32 %v678, %v766
      %v783 = vadd.f32 %v681, %v767
      %v784 = vadd.f32 %v686, %v768
      %v785 = vadd.f32 %v689, %v769
      %v786 = vadd.f32 %v694, %v770
      %v787 = vadd.f32 %v697, %v771
      %v788 = vadd.f32 %v702, %v772
      %v789 = vadd.f32 %v705, %v773
      %v790 = vadd.f32 %v710, %v774
      %v791 = vadd.f32 %v713, %v775
      %v792 = vadd.f32 %v718, %v776
      %v793 = vadd.f32 %v721, %v777
      %v794 = vadd.f32 %v726, %v778
      %v795 = vadd.f32 %v729, %v779
      %v796 = vmul.f32 %v780, 0.7978846
      %v797 = vmul.f32 %v781, 0.7978846
      %v798 = vmul.f32 %v782, 0.7978846
      %v799 = vmul.f32 %v783, 0.7978846
      %v800 = vmul.f32 %v784, 0.7978846
      %v801 = vmul.f32 %v785, 0.7978846
      %v802 = vmul.f32 %v786, 0.7978846
      %v803 = vmul.f32 %v787, 0.7978846
      %v804 = vmul.f32 %v788, 0.7978846
      %v805 = vmul.f32 %v789, 0.7978846
      %v806 = vmul.f32 %v790, 0.7978846
      %v807 = vmul.f32 %v791, 0.7978846
      %v808 = vmul.f32 %v792, 0.7978846
      %v809 = vmul.f32 %v793, 0.7978846
      %v810 = vmul.f32 %v794, 0.7978846
      %v811 = vmul.f32 %v795, 0.7978846
      %v812 = vtanh.pop %v796
      %v813 = vtanh.pop %v797
      %v814 = vtanh.pop %v798
      %v815 = vtanh.pop %v799
      %v816 = vtanh.pop %v800
      %v817 = vtanh.pop %v801
      %v818 = vtanh.pop %v802
      %v819 = vtanh.pop %v803
      %v820 = vtanh.pop %v804
      %v821 = vtanh.pop %v805
      %v822 = vtanh.pop %v806
      %v823 = vtanh.pop %v807
      %v824 = vtanh.pop %v808
      %v825 = vtanh.pop %v809
      %v826 = vtanh.pop %v810
      %v827 = vtanh.pop %v811
      %v828 = vadd.f32 %v812, 1.0
      %v829 = vadd.f32 %v813, 1.0
      %v830 = vadd.f32 %v814, 1.0
      %v831 = vadd.f32 %v815, 1.0
      %v832 = vadd.f32 %v816, 1.0
      %v833 = vadd.f32 %v817, 1.0
      %v834 = vadd.f32 %v818, 1.0
      %v835 = vadd.f32 %v819, 1.0
      %v836 = vadd.f32 %v820, 1.0
      %v837 = vadd.f32 %v821, 1.0
      %v838 = vadd.f32 %v822, 1.0
      %v839 = vadd.f32 %v823, 1.0
      %v840 = vadd.f32 %v824, 1.0
      %v841 = vadd.f32 %v825, 1.0
      %v842 = vadd.f32 %v826, 1.0
      %v843 = vadd.f32 %v827, 1.0
      %v844 = vmul.f32 %v828, 0.5
      %v845 = vmul.f32 %v829, 0.5
      %v846 = vmul.f32 %v830, 0.5
      %v847 = vmul.f32 %v831, 0.5
      %v848 = vmul.f32 %v832, 0.5
      %v849 = vmul.f32 %v833, 0.5
      %v850 = vmul.f32 %v834, 0.5
      %v851 = vmul.f32 %v835, 0.5
      %v852 = vmul.f32 %v836, 0.5
      %v853 = vmul.f32 %v837, 0.5
      %v854 = vmul.f32 %v838, 0.5
      %v855 = vmul.f32 %v839, 0.5
      %v856 = vmul.f32 %v840, 0.5
      %v857 = vmul.f32 %v841, 0.5
      %v858 = vmul.f32 %v842, 0.5
      %v859 = vmul.f32 %v843, 0.5
      %v860 = vmul.f32 %v670, %v844
      %v861 = vmul.f32 %v673, %v845
      %v862 = vmul.f32 %v678, %v846
      %v863 = vmul.f32 %v681, %v847
      %v864 = vmul.f32 %v686, %v848
      %v865 = vmul.f32 %v689, %v849
      %v866 = vmul.f32 %v694, %v850
      %v867 = vmul.f32 %v697, %v851
      %v868 = vmul.f32 %v702, %v852
      %v869 = vmul.f32 %v705, %v853
      %v870 = vmul.f32 %v710, %v854
      %v871 = vmul.f32 %v713, %v855
      %v872 = vmul.f32 %v718, %v856
      %v873 = vmul.f32 %v721, %v857
      %v874 = vmul.f32 %v726, %v858
      %v875 = vmul.f32 %v729, %v859
      %v876 = vpack.c.bf16 %v861, %v860
      %v877 = vpack.c.bf16 %v863, %v862
      %v878 = vpack.c.bf16 %v865, %v864
      %v879 = vpack.c.bf16 %v867, %v866
      %v880 = vpack.c.bf16 %v869, %v868
      %v881 = vpack.c.bf16 %v871, %v870
      %v882 = vpack.c.bf16 %v873, %v872
      %v883 = vpack.c.bf16 %v875, %v874
      %v884 = vld [vmem:[%s3] sm:$0xf]
      %v885 = vld [vmem:[%s3 + $0x4] sm:$0xf]
      %v886 = vld [vmem:[%s4] sm:$0x1]
      %v888 = vlaneseq
      %v889 = vshrl.u32 %v888, 7
      %v890 = vsub.s32 0, %v889
      %v891 = vrot.slane %v886, %v890
      %v895 = vunpack.c.l.b16 %v884
      %v896 = vunpack.c.l.b16 %v885
      %v897 = vpack.c.b16 %v896, %v895
      %vm899 = vcmask 130048
      %v901 = vsel %vm899, %v876, 0
      %v904 = vsel %vm899, %v877, 0
      %v907 = vsel %vm899, %v878, 0
      %v910 = vsel %vm899, %v879, 0
      %v913 = vsel %vm899, %v880, 0
      %v916 = vsel %vm899, %v881, 0
      %v919 = vsel %vm899, %v882, 0
      %v922 = vsel %vm899, %v883, 0
      %924 = vmatprep.subr.bf16.mxu0 0
      %925 = vmatpush1.bf16.msra.mxu0 %v897
      %926 = vmatprep.subr.bf16.mxu0 0
      %927 = vmatpush1.bf16.msra.mxu0 0
      %928 = vmatprep.subr.bf16.mxu0 0
      %929 = vmatpush1.bf16.msra.mxu0 0
      %930 = vmatprep.subr.bf16.mxu0 0
      %931 = vmatpush1.bf16.msra.mxu0 0
      %932 = vmatprep.subr.bf16.mxu0 0
      %933 = vmatpush1.bf16.msra.mxu0 0
      %934 = vmatprep.subr.bf16.mxu0 0
      %935 = vmatpush1.bf16.msra.mxu0 0
      %936 = vmatprep.subr.bf16.mxu0 0
      %937 = vmatpush1.bf16.msra.mxu0 0
      %938 = vmatprep.subr.bf16.mxu0 0
      %939 = vmatpush1.bf16.msra.mxu0 0
      %940 = vmatprep.subr.bf16.mxu0 0
      %941 = vmatpush1.bf16.msra.mxu0 0
      %942 = vmatprep.subr.bf16.mxu0 0
      %943 = vmatpush1.bf16.msra.mxu0 0
      %944 = vmatprep.subr.bf16.mxu0 0
      %945 = vmatpush1.bf16.msra.mxu0 0
      %946 = vmatprep.subr.bf16.mxu0 0
      %947 = vmatpush1.bf16.msra.mxu0 0
      %948 = vmatprep.subr.bf16.mxu0 0
      %949 = vmatpush1.bf16.msra.mxu0 0
      %950 = vmatprep.subr.bf16.mxu0 0
      %951 = vmatpush1.bf16.msra.mxu0 0
      %952 = vmatprep.subr.bf16.mxu0 0
      %953 = vmatpush1.bf16.msra.mxu0 0
      %954 = vmatprep.subr.bf16.mxu0 0
      %955 = vmatpush1.bf16.msra.mxu0 0
      %956 = vmatprep.mubr.bf16.mxu0 0
      %957 = vmatmul.mubr.bf16.gmra.mrb[0].mxu0 %v901
      %v958 = vpop.f32.mrb[0].mxu0
      %v959 = vadd.f32 %v891, %v958
      %v960 = vpop.f32.mrb[0].mxu0
      %v961 = vpop.f32.mrb[0].mxu0
      %v962 = vadd.f32 %v891, %v961
      %v963 = vpop.f32.mrb[0].mxu0
      %964 = vmatprep.mubr.bf16.mxu0 0
      %965 = vmatmul.mubr.bf16.gmra.mrb[0].mxu0 %v904
      %v966 = vpop.f32.mrb[0].mxu0
      %v967 = vadd.f32 %v891, %v966
      %v968 = vpop.f32.mrb[0].mxu0
      %v969 = vpop.f32.mrb[0].mxu0
      %v970 = vadd.f32 %v891, %v969
      %v971 = vpop.f32.mrb[0].mxu0
      %972 = vmatprep.mubr.bf16.mxu0 0
      %973 = vmatmul.mubr.bf16.gmra.mrb[0].mxu0 %v907
      %v974 = vpop.f32.mrb[0].mxu0
      %v975 = vadd.f32 %v891, %v974
      %v976 = vpop.f32.mrb[0].mxu0
      %v977 = vpop.f32.mrb[0].mxu0
      %v978 = vadd.f32 %v891, %v977
      %v979 = vpop.f32.mrb[0].mxu0
      %980 = vmatprep.mubr.bf16.mxu0 0
      %981 = vmatmul.mubr.bf16.gmra.mrb[0].mxu0 %v910
      %v982 = vpop.f32.mrb[0].mxu0
      %v983 = vadd.f32 %v891, %v982
      %v984 = vpop.f32.mrb[0].mxu0
      %v985 = vpop.f32.mrb[0].mxu0
      %v986 = vadd.f32 %v891, %v985
      %v987 = vpop.f32.mrb[0].mxu0
      %988 = vmatprep.mubr.bf16.mxu0 0
      %989 = vmatmul.mubr.bf16.gmra.mrb[0].mxu0 %v913
      %v990 = vpop.f32.mrb[0].mxu0
      %v991 = vadd.f32 %v891, %v990
      %v992 = vpop.f32.mrb[0].mxu0
      %v993 = vpop.f32.mrb[0].mxu0
      %v994 = vadd.f32 %v891, %v993
      %v995 = vpop.f32.mrb[0].mxu0
      %996 = vmatprep.mubr.bf16.mxu0 0
      %997 = vmatmul.mubr.bf16.gmra.mrb[0].mxu0 %v916
      %v998 = vpop.f32.mrb[0].mxu0
      %v999 = vadd.f32 %v891, %v998
      %v1000 = vpop.f32.mrb[0].mxu0
      %v1001 = vpop.f32.mrb[0].mxu0
      %v1002 = vadd.f32 %v891, %v1001
      %v1003 = vpop.f32.mrb[0].mxu0
      %1004 = vmatprep.mubr.bf16.mxu0 0
      %1005 = vmatmul.mubr.bf16.gmra.mrb[0].mxu0 %v919
      %v1006 = vpop.f32.mrb[0].mxu0
      %v1007 = vadd.f32 %v891, %v1006
      %v1008 = vpop.f32.mrb[0].mxu0
      %v1009 = vpop.f32.mrb[0].mxu0
      %v1010 = vadd.f32 %v891, %v1009
      %v1011 = vpop.f32.mrb[0].mxu0
      %1012 = vmatprep.mubr.bf16.mxu0 0
      %1013 = vmatmul.mubr.bf16.gmra.mrb[0].mxu0 %v922
      %v1014 = vpop.f32.mrb[0].mxu0
      %v1015 = vadd.f32 %v891, %v1014
      %v1016 = vpop.f32.mrb[0].mxu0
      %v1017 = vpop.f32.mrb[0].mxu0
      %v1018 = vadd.f32 %v891, %v1017
      %v1019 = vpop.f32.mrb[0].mxu0
      %1020 = vdwg.mxu0
      %v1021 = vpack.c.bf16 %v962, %v959
      %v1022 = vpack.c.bf16 %v970, %v967
      %v1023 = vpack.c.bf16 %v978, %v975
      %v1024 = vpack.c.bf16 %v986, %v983
      %v1025 = vpack.c.bf16 %v994, %v991
      %v1026 = vpack.c.bf16 %v1002, %v999
      %v1027 = vpack.c.bf16 %v1010, %v1007
      %v1028 = vpack.c.bf16 %v1018, %v1015
      %v1037 = vunpack.c.l.b16 %v1021
      %v1038 = vunpack.c.h.b16 %v1021
      %v1039 = vunpack.c.l.b16 %v1022
      %v1040 = vunpack.c.h.b16 %v1022
      %v1041 = vunpack.c.l.b16 %v1023
      %v1042 = vunpack.c.h.b16 %v1023
      %v1043 = vunpack.c.l.b16 %v1024
      %v1044 = vunpack.c.h.b16 %v1024
      %v1045 = vunpack.c.l.b16 %v1025
      %v1046 = vunpack.c.h.b16 %v1025
      %v1047 = vunpack.c.l.b16 %v1026
      %v1048 = vunpack.c.h.b16 %v1026
      %v1049 = vunpack.c.l.b16 %v1027
      %v1050 = vunpack.c.h.b16 %v1027
      %v1051 = vunpack.c.l.b16 %v1028
      %v1052 = vunpack.c.h.b16 %v1028
      %v1053 = vpack.c.b16 %v1037, %v1037
      %v1054 = vpack.c.b16 %v1038, %v1038
      %v1055 = vpack.c.b16 %v1039, %v1039
      %v1056 = vpack.c.b16 %v1040, %v1040
      %v1057 = vpack.c.b16 %v1041, %v1041
      %v1058 = vpack.c.b16 %v1042, %v1042
      %v1059 = vpack.c.b16 %v1043, %v1043
      %v1060 = vpack.c.b16 %v1044, %v1044
      %v1061 = vpack.c.b16 %v1045, %v1045
      %v1062 = vpack.c.b16 %v1046, %v1046
      %v1063 = vpack.c.b16 %v1047, %v1047
      %v1064 = vpack.c.b16 %v1048, %v1048
      %v1065 = vpack.c.b16 %v1049, %v1049
      %v1066 = vpack.c.b16 %v1050, %v1050
      %v1067 = vpack.c.b16 %v1051, %v1051
      %v1068 = vpack.c.b16 %v1052, %v1052
      %vm1085 = vcmask 60416
      %1086 = vst.msk [vmem:[%s510] sm:$0xf] %vm1085, %v1053
      %1087 = vst.msk [vmem:[%s510 + $0x4] sm:$0xf] %vm1085, %v1054
      %1088 = vst.msk [vmem:[%s510 + $0x8] sm:$0xf] %vm1085, %v1055
      %1089 = vst.msk [vmem:[%s510 + $0xc] sm:$0xf] %vm1085, %v1056
      %1090 = vst.msk [vmem:[%s510 + $0x10] sm:$0xf] %vm1085, %v1057
      %1091 = vst.msk [vmem:[%s510 + $0x14] sm:$0xf] %vm1085, %v1058
      %1092 = vst.msk [vmem:[%s510 + $0x18] sm:$0xf] %vm1085, %v1059
      %1093 = vst.msk [vmem:[%s510 + $0x1c] sm:$0xf] %vm1085, %v1060
      %1094 = vst.msk [vmem:[%s510 + $0x20] sm:$0xf] %vm1085, %v1061
      %1095 = vst.msk [vmem:[%s510 + $0x24] sm:$0xf] %vm1085, %v1062
      %1096 = vst.msk [vmem:[%s510 + $0x28] sm:$0xf] %vm1085, %v1063
      %1097 = vst.msk [vmem:[%s510 + $0x2c] sm:$0xf] %vm1085, %v1064
      %1098 = vst.msk [vmem:[%s510 + $0x30] sm:$0xf] %vm1085, %v1065
      %1099 = vst.msk [vmem:[%s510 + $0x34] sm:$0xf] %vm1085, %v1066
      %1100 = vst.msk [vmem:[%s510 + $0x38] sm:$0xf] %vm1085, %v1067
      %1101 = vst.msk [vmem:[%s510 + $0x3c] sm:$0xf] %vm1085, %v1068
      %v1102 = vld [vmem:[%s5] sm:$0xf]
      %v1103 = vld [vmem:[%s5 + $0x4] sm:$0xf]
      %s1104 = scalar_lea.vmem %s5, 8
      %v1105 = vld [vmem:[%s1104] sm:$0xf]
      %v1106 = vld [vmem:[%s1104 + $0x4] sm:$0xf]
      %v1109 = vunpack.c.l.b16 %v1105
      %v1110 = vunpack.c.l.b16 %v1106
      %v1111 = vpack.c.b16 %v1110, %v1109
      %1113 = vmatprep.subr.bf16.mxu0 0
      %1114 = vmatpush1.bf16.msra.mxu0 %v1111
      %1115 = vmatprep.subr.bf16.mxu0 0
      %1116 = vmatpush1.bf16.msra.mxu0 0
      %1117 = vmatprep.subr.bf16.mxu0 0
      %1118 = vmatpush1.bf16.msra.mxu0 0
      %1119 = vmatprep.subr.bf16.mxu0 0
      %1120 = vmatpush1.bf16.msra.mxu0 0
      %1121 = vmatprep.subr.bf16.mxu0 0
      %1122 = vmatpush1.bf16.msra.mxu0 0
      %1123 = vmatprep.subr.bf16.mxu0 0
      %1124 = vmatpush1.bf16.msra.mxu0 0
      %1125 = vmatprep.subr.bf16.mxu0 0
      %1126 = vmatpush1.bf16.msra.mxu0 0
      %1127 = vmatprep.subr.bf16.mxu0 0
      %1128 = vmatpush1.bf16.msra.mxu0 0
      %1129 = vmatprep.subr.bf16.mxu0 0
      %1130 = vmatpush1.bf16.msra.mxu0 0
      %1131 = vmatprep.subr.bf16.mxu0 0
      %1132 = vmatpush1.bf16.msra.mxu0 0
      %1133 = vmatprep.subr.bf16.mxu0 0
      %1134 = vmatpush1.bf16.msra.mxu0 0
      %1135 = vmatprep.subr.bf16.mxu0 0
      %1136 = vmatpush1.bf16.msra.mxu0 0
      %1137 = vmatprep.subr.bf16.mxu0 0
      %1138 = vmatpush1.bf16.msra.mxu0 0
      %1139 = vmatprep.subr.bf16.mxu0 0
      %1140 = vmatpush1.bf16.msra.mxu0 0
      %1141 = vmatprep.subr.bf16.mxu0 0
      %1142 = vmatpush1.bf16.msra.mxu0 0
      %1143 = vmatprep.subr.bf16.mxu0 0
      %1144 = vmatpush1.bf16.msra.mxu0 0
      %1145 = vmatprep.mubr.bf16.mxu0 0
      %1146 = vmatmul.mubr.bf16.gmra.mrb[0].mxu0 %v907
      %v1147 = vpop.f32.mrb[0].mxu0
      %v1148 = vadd.f32 0.0, %v1147
      %v1149 = vpop.f32.mrb[0].mxu0
      %v1150 = vpop.f32.mrb[0].mxu0
      %v1151 = vadd.f32 0.0, %v1150
      %v1152 = vpop.f32.mrb[0].mxu0
      %1153 = vmatprep.mubr.bf16.mxu0 0
      %1154 = vmatmul.mubr.bf16.gmra.mrb[0].mxu0 %v910
      %v1155 = vpop.f32.mrb[0].mxu0
      %v1156 = vadd.f32 0.0, %v1155
      %v1157 = vpop.f32.mrb[0].mxu0
      %v1158 = vpop.f32.mrb[0].mxu0
      %v1159 = vadd.f32 0.0, %v1158
      %v1160 = vpop.f32.mrb[0].mxu0
      %1161 = vdwg.mxu0
      %v1164 = vunpack.c.l.b16 %v1102
      %v1165 = vunpack.c.l.b16 %v1103
      %v1166 = vpack.c.b16 %v1165, %v1164
      %1168 = vmatprep.subr.bf16.mxu0 0
      %1169 = vmatpush1.bf16.msra.mxu0 %v1166
      %1170 = vmatprep.subr.bf16.mxu0 0
      %1171 = vmatpush1.bf16.msra.mxu0 0
      %1172 = vmatprep.subr.bf16.mxu0 0
      %1173 = vmatpush1.bf16.msra.mxu0 0
      %1174 = vmatprep.subr.bf16.mxu0 0
      %1175 = vmatpush1.bf16.msra.mxu0 0
      %1176 = vmatprep.subr.bf16.mxu0 0
      %1177 = vmatpush1.bf16.msra.mxu0 0
      %1178 = vmatprep.subr.bf16.mxu0 0
      %1179 = vmatpush1.bf16.msra.mxu0 0
      %1180 = vmatprep.subr.bf16.mxu0 0
      %1181 = vmatpush1.bf16.msra.mxu0 0
      %1182 = vmatprep.subr.bf16.mxu0 0
      %1183 = vmatpush1.bf16.msra.mxu0 0
      %1184 = vmatprep.subr.bf16.mxu0 0
      %1185 = vmatpush1.bf16.msra.mxu0 0
      %1186 = vmatprep.subr.bf16.mxu0 0
      %1187 = vmatpush1.bf16.msra.mxu0 0
      %1188 = vmatprep.subr.bf16.mxu0 0
      %1189 = vmatpush1.bf16.msra.mxu0 0
      %1190 = vmatprep.subr.bf16.mxu0 0
      %1191 = vmatpush1.bf16.msra.mxu0 0
      %1192 = vmatprep.subr.bf16.mxu0 0
      %1193 = vmatpush1.bf16.msra.mxu0 0
      %1194 = vmatprep.subr.bf16.mxu0 0
      %1195 = vmatpush1.bf16.msra.mxu0 0
      %1196 = vmatprep.subr.bf16.mxu0 0
      %1197 = vmatpush1.bf16.msra.mxu0 0
      %1198 = vmatprep.subr.bf16.mxu0 0
      %1199 = vmatpush1.bf16.msra.mxu0 0
      %1200 = vmatprep.mubr.bf16.mxu0 0
      %1201 = vmatmul.mubr.bf16.gmra.mrb[0].mxu0 %v901
      %v1202 = vpop.f32.mrb[0].mxu0
      %v1203 = vadd.f32 %v1148, %v1202
      %v1204 = vpop.f32.mrb[0].mxu0
      %v1205 = vpop.f32.mrb[0].mxu0
      %v1206 = vadd.f32 %v1151, %v1205
      %v1207 = vpop.f32.mrb[0].mxu0
      %1208 = vmatprep.mubr.bf16.mxu0 0
      %1209 = vmatmul.mubr.bf16.gmra.mrb[0].mxu0 %v904
      %v1210 = vpop.f32.mrb[0].mxu0
      %v1211 = vadd.f32 %v1156, %v1210
      %v1212 = vpop.f32.mrb[0].mxu0
      %v1213 = vpop.f32.mrb[0].mxu0
      %v1214 = vadd.f32 %v1159, %v1213
      %v1215 = vpop.f32.mrb[0].mxu0
      %1216 = vdwg.mxu0
      %s1217 = scalar_lea.vmem %s5, 16
      %v1218 = vld [vmem:[%s1217] sm:$0xf]
      %v1219 = vld [vmem:[%s1217 + $0x4] sm:$0xf]
      %v1222 = vunpack.c.l.b16 %v1218
      %v1223 = vunpack.c.l.b16 %v1219
      %v1224 = vpack.c.b16 %v1223, %v1222
      %1226 = vmatprep.subr.bf16.mxu0 0
      %1227 = vmatpush1.bf16.msra.mxu0 %v1224
      %1228 = vmatprep.subr.bf16.mxu0 0
      %1229 = vmatpush1.bf16.msra.mxu0 0
      %1230 = vmatprep.subr.bf16.mxu0 0
      %1231 = vmatpush1.bf16.msra.mxu0 0
      %1232 = vmatprep.subr.bf16.mxu0 0
      %1233 = vmatpush1.bf16.msra.mxu0 0
      %1234 = vmatprep.subr.bf16.mxu0 0
      %1235 = vmatpush1.bf16.msra.mxu0 0
      %1236 = vmatprep.subr.bf16.mxu0 0
      %1237 = vmatpush1.bf16.msra.mxu0 0
      %1238 = vmatprep.subr.bf16.mxu0 0
      %1239 = vmatpush1.bf16.msra.mxu0 0
      %1240 = vmatprep.subr.bf16.mxu0 0
      %1241 = vmatpush1.bf16.msra.mxu0 0
      %1242 = vmatprep.subr.bf16.mxu0 0
      %1243 = vmatpush1.bf16.msra.mxu0 0
      %1244 = vmatprep.subr.bf16.mxu0 0
      %1245 = vmatpush1.bf16.msra.mxu0 0
      %1246 = vmatprep.subr.bf16.mxu0 0
      %1247 = vmatpush1.bf16.msra.mxu0 0
      %1248 = vmatprep.subr.bf16.mxu0 0
      %1249 = vmatpush1.bf16.msra.mxu0 0
      %1250 = vmatprep.subr.bf16.mxu0 0
      %1251 = vmatpush1.bf16.msra.mxu0 0
      %1252 = vmatprep.subr.bf16.mxu0 0
      %1253 = vmatpush1.bf16.msra.mxu0 0
      %1254 = vmatprep.subr.bf16.mxu0 0
      %1255 = vmatpush1.bf16.msra.mxu0 0
      %1256 = vmatprep.subr.bf16.mxu0 0
      %1257 = vmatpush1.bf16.msra.mxu0 0
      %1258 = vmatprep.mubr.bf16.mxu0 0
      %1259 = vmatmul.mubr.bf16.gmra.mrb[0].mxu0 %v913
      %v1260 = vpop.f32.mrb[0].mxu0
      %v1261 = vadd.f32 0.0, %v1260
      %v1262 = vpop.f32.mrb[0].mxu0
      %v1263 = vpop.f32.mrb[0].mxu0
      %v1264 = vadd.f32 0.0, %v1263
      %v1265 = vpop.f32.mrb[0].mxu0
      %1266 = vmatprep.mubr.bf16.mxu0 0
      %1267 = vmatmul.mubr.bf16.gmra.mrb[0].mxu0 %v916
      %v1268 = vpop.f32.mrb[0].mxu0
      %v1269 = vadd.f32 0.0, %v1268
      %v1270 = vpop.f32.mrb[0].mxu0
      %v1271 = vpop.f32.mrb[0].mxu0
      %v1272 = vadd.f32 0.0, %v1271
      %v1273 = vpop.f32.mrb[0].mxu0
      %1274 = vdwg.mxu0
      %v1275 = vadd.f32 %v1203, %v1261
      %v1276 = vadd.f32 %v1206, %v1264
      %v1277 = vadd.f32 %v1211, %v1269
      %v1278 = vadd.f32 %v1214, %v1272
      %s1279 = scalar_lea.vmem %s5, 24
      %v1280 = vld [vmem:[%s1279] sm:$0xf]
      %v1281 = vld [vmem:[%s1279 + $0x4] sm:$0xf]
      %v1284 = vunpack.c.l.b16 %v1280
      %v1285 = vunpack.c.l.b16 %v1281
      %v1286 = vpack.c.b16 %v1285, %v1284
      %1288 = vmatprep.subr.bf16.mxu0 0
      %1289 = vmatpush1.bf16.msra.mxu0 %v1286
      %1290 = vmatprep.subr.bf16.mxu0 0
      %1291 = vmatpush1.bf16.msra.mxu0 0
      %1292 = vmatprep.subr.bf16.mxu0 0
      %1293 = vmatpush1.bf16.msra.mxu0 0
      %1294 = vmatprep.subr.bf16.mxu0 0
      %1295 = vmatpush1.bf16.msra.mxu0 0
      %1296 = vmatprep.subr.bf16.mxu0 0
      %1297 = vmatpush1.bf16.msra.mxu0 0
      %1298 = vmatprep.subr.bf16.mxu0 0
      %1299 = vmatpush1.bf16.msra.mxu0 0
      %1300 = vmatprep.subr.bf16.mxu0 0
      %1301 = vmatpush1.bf16.msra.mxu0 0
      %1302 = vmatprep.subr.bf16.mxu0 0
      %1303 = vmatpush1.bf16.msra.mxu0 0
      %1304 = vmatprep.subr.bf16.mxu0 0
      %1305 = vmatpush1.bf16.msra.mxu0 0
      %1306 = vmatprep.subr.bf16.mxu0 0
      %1307 = vmatpush1.bf16.msra.mxu0 0
      %1308 = vmatprep.subr.bf16.mxu0 0
      %1309 = vmatpush1.bf16.msra.mxu0 0
      %1310 = vmatprep.subr.bf16.mxu0 0
      %1311 = vmatpush1.bf16.msra.mxu0 0
      %1312 = vmatprep.subr.bf16.mxu0 0
      %1313 = vmatpush1.bf16.msra.mxu0 0
      %1314 = vmatprep.subr.bf16.mxu0 0
      %1315 = vmatpush1.bf16.msra.mxu0 0
      %1316 = vmatprep.subr.bf16.mxu0 0
      %1317 = vmatpush1.bf16.msra.mxu0 0
      %1318 = vmatprep.subr.bf16.mxu0 0
      %1319 = vmatpush1.bf16.msra.mxu0 0
      %1320 = vmatprep.mubr.bf16.mxu0 0
      %1321 = vmatmul.mubr.bf16.gmra.mrb[0].mxu0 %v919
      %v1322 = vpop.f32.mrb[0].mxu0
      %v1323 = vadd.f32 0.0, %v1322
      %v1324 = vpop.f32.mrb[0].mxu0
      %v1325 = vpop.f32.mrb[0].mxu0
      %v1326 = vadd.f32 0.0, %v1325
      %v1327 = vpop.f32.mrb[0].mxu0
      %1328 = vmatprep.mubr.bf16.mxu0 0
      %1329 = vmatmul.mubr.bf16.gmra.mrb[0].mxu0 %v922
      %v1330 = vpop.f32.mrb[0].mxu0
      %v1331 = vadd.f32 0.0, %v1330
      %v1332 = vpop.f32.mrb[0].mxu0
      %v1333 = vpop.f32.mrb[0].mxu0
      %v1334 = vadd.f32 0.0, %v1333
      %v1335 = vpop.f32.mrb[0].mxu0
      %1336 = vdwg.mxu0
      %v1337 = vadd.f32 %v1275, %v1323
      %v1338 = vadd.f32 %v1276, %v1326
      %v1339 = vadd.f32 %v1277, %v1331
      %v1340 = vadd.f32 %v1278, %v1334
      %v1341 = vld [vmem:[%s6] sm:$0x1]
      %v1343 = vlaneseq
      %v1344 = vshrl.u32 %v1343, 7
      %v1345 = vsub.s32 0, %v1344
      %v1346 = vrot.slane %v1341, %v1345
      %v1348 = vadd.f32 %v1337, %v1346
      %v1349 = vadd.f32 %v1338, %v1346
      %v1350 = vadd.f32 %v1339, %v1346
      %v1351 = vadd.f32 %v1340, %v1346
      %v1352 = vmul.f32 %v1348, %v1348
      %v1353 = vmul.f32 %v1349, %v1349
      %v1354 = vmul.f32 %v1350, %v1350
      %v1355 = vmul.f32 %v1351, %v1351
      %v1356 = vmul.f32 %v1348, %v1352
      %v1357 = vmul.f32 %v1349, %v1353
      %v1358 = vmul.f32 %v1350, %v1354
      %v1359 = vmul.f32 %v1351, %v1355
      %v1360 = vmul.f32 %v1356, 0.044715
      %v1361 = vmul.f32 %v1357, 0.044715
      %v1362 = vmul.f32 %v1358, 0.044715
      %v1363 = vmul.f32 %v1359, 0.044715
      %v1364 = vadd.f32 %v1348, %v1360
      %v1365 = vadd.f32 %v1349, %v1361
      %v1366 = vadd.f32 %v1350, %v1362
      %v1367 = vadd.f32 %v1351, %v1363
      %v1368 = vmul.f32 %v1364, 0.7978846
      %v1369 = vmul.f32 %v1365, 0.7978846
      %v1370 = vmul.f32 %v1366, 0.7978846
      %v1371 = vmul.f32 %v1367, 0.7978846
      %v1372 = vtanh.pop %v1368
      %v1373 = vtanh.pop %v1369
      %v1374 = vtanh.pop %v1370
      %v1375 = vtanh.pop %v1371
      %v1376 = vadd.f32 %v1372, 1.0
      %v1377 = vadd.f32 %v1373, 1.0
      %v1378 = vadd.f32 %v1374, 1.0
      %v1379 = vadd.f32 %v1375, 1.0
      %v1380 = vmul.f32 %v1376, 0.5
      %v1381 = vmul.f32 %v1377, 0.5
      %v1382 = vmul.f32 %v1378, 0.5
      %v1383 = vmul.f32 %v1379, 0.5
      %v1384 = vmul.f32 %v1348, %v1380
      %v1385 = vmul.f32 %v1349, %v1381
      %v1386 = vmul.f32 %v1350, %v1382
      %v1387 = vmul.f32 %v1351, %v1383
      %v1388 = vpack.c.bf16 %v1385, %v1384
      %v1389 = vpack.c.bf16 %v1387, %v1386
      %v1390 = vld [vmem:[%s7] sm:$0xf]
      %v1391 = vld [vmem:[%s7 + $0x4] sm:$0xf]
      %v1392 = vld [vmem:[%s7 + $0x8] sm:$0xf]
      %v1393 = vld [vmem:[%s7 + $0xc] sm:$0xf]
      %v1394 = vld [vmem:[%s8] sm:$0x1]
      %v1396 = vlaneseq
      %v1397 = vshrl.u32 %v1396, 7
      %v1398 = vsub.s32 0, %v1397
      %v1399 = vrot.slane %v1394, %v1398
      %v1405 = vunpack.c.l.b16 %v1390
      %v1406 = vunpack.c.l.b16 %v1391
      %v1407 = vunpack.c.l.b16 %v1392
      %v1408 = vunpack.c.l.b16 %v1393
      %v1409 = vpack.c.b16 %v1406, %v1405
      %v1410 = vpack.c.b16 %v1408, %v1407
      %vm1413 = vcmask 261120
      %v1415 = vsel %vm1413, %v1388, 0
      %v1418 = vsel %vm1413, %v1389, 0
      %1420 = vmatprep.subr.bf16.mxu0 0
      %1421 = vmatpush1.bf16.msra.mxu0 %v1409
      %1422 = vmatprep.subr.bf16.mxu0 0
      %1423 = vmatpush1.bf16.msra.mxu0 %v1410
      %1424 = vmatprep.subr.bf16.mxu0 0
      %1425 = vmatpush1.bf16.msra.mxu0 0
      %1426 = vmatprep.subr.bf16.mxu0 0
      %1427 = vmatpush1.bf16.msra.mxu0 0
      %1428 = vmatprep.subr.bf16.mxu0 0
      %1429 = vmatpush1.bf16.msra.mxu0 0
      %1430 = vmatprep.subr.bf16.mxu0 0
      %1431 = vmatpush1.bf16.msra.mxu0 0
      %1432 = vmatprep.subr.bf16.mxu0 0
      %1433 = vmatpush1.bf16.msra.mxu0 0
      %1434 = vmatprep.subr.bf16.mxu0 0
      %1435 = vmatpush1.bf16.msra.mxu0 0
      %1436 = vmatprep.subr.bf16.mxu0 0
      %1437 = vmatpush1.bf16.msra.mxu0 0
      %1438 = vmatprep.subr.bf16.mxu0 0
      %1439 = vmatpush1.bf16.msra.mxu0 0
      %1440 = vmatprep.subr.bf16.mxu0 0
      %1441 = vmatpush1.bf16.msra.mxu0 0
      %1442 = vmatprep.subr.bf16.mxu0 0
      %1443 = vmatpush1.bf16.msra.mxu0 0
      %1444 = vmatprep.subr.bf16.mxu0 0
      %1445 = vmatpush1.bf16.msra.mxu0 0
      %1446 = vmatprep.subr.bf16.mxu0 0
      %1447 = vmatpush1.bf16.msra.mxu0 0
      %1448 = vmatprep.subr.bf16.mxu0 0
      %1449 = vmatpush1.bf16.msra.mxu0 0
      %1450 = vmatprep.subr.bf16.mxu0 0
      %1451 = vmatpush1.bf16.msra.mxu0 0
      %1452 = vmatprep.mubr.bf16.mxu0 0
      %1453 = vmatmul.mubr.bf16.gmra.mrb[0].mxu0 %v1415
      %v1454 = vpop.f32.mrb[0].mxu0
      %v1455 = vadd.f32 %v1399, %v1454
      %v1456 = vpop.f32.mrb[0].mxu0
      %v1457 = vpop.f32.mrb[0].mxu0
      %v1458 = vadd.f32 %v1399, %v1457
      %v1459 = vpop.f32.mrb[0].mxu0
      %1460 = vmatprep.mubr.bf16.mxu0 0
      %1461 = vmatmul.mubr.bf16.gmra.mrb[0].mxu0 %v1418
      %v1462 = vpop.f32.mrb[0].mxu0
      %v1463 = vadd.f32 %v1399, %v1462
      %v1464 = vpop.f32.mrb[0].mxu0
      %v1465 = vpop.f32.mrb[0].mxu0
      %v1466 = vadd.f32 %v1399, %v1465
      %v1467 = vpop.f32.mrb[0].mxu0
      %1468 = vdwg.mxu0
      %v1469 = vpack.c.bf16 %v1458, %v1455
      %v1470 = vpack.c.bf16 %v1466, %v1463
      %v1473 = vunpack.c.l.b16 %v1469
      %v1474 = vunpack.c.h.b16 %v1469
      %v1475 = vunpack.c.l.b16 %v1470
      %v1476 = vunpack.c.h.b16 %v1470
      %v1477 = vpack.c.b16 %v1473, %v1473
      %v1478 = vpack.c.b16 %v1474, %v1474
      %v1479 = vpack.c.b16 %v1475, %v1475
      %v1480 = vpack.c.b16 %v1476, %v1476
      %vm1485 = vcmask 125952
      %1486 = vst.msk [vmem:[%s516] sm:$0xf] %vm1485, %v1477
      %1487 = vst.msk [vmem:[%s516 + $0x4] sm:$0xf] %vm1485, %v1478
      %1488 = vst.msk [vmem:[%s516 + $0x8] sm:$0xf] %vm1485, %v1479
      %1489 = vst.msk [vmem:[%s516 + $0xc] sm:$0xf] %vm1485, %v1480
      %v1490 = vld [vmem:[%s9] sm:$0xf]
      %v1491 = vld [vmem:[%s9 + $0x4] sm:$0xf]
      %v1492 = vld [vmem:[%s9 + $0x8] sm:$0xf]
      %v1493 = vld [vmem:[%s9 + $0xc] sm:$0xf]
      %s1494 = scalar_lea.vmem %s9, 16
      %v1495 = vld [vmem:[%s1494] sm:$0xf]
      %v1496 = vld [vmem:[%s1494 + $0x4] sm:$0xf]
      %v1497 = vld [vmem:[%s1494 + $0x8] sm:$0xf]
      %v1498 = vld [vmem:[%s1494 + $0xc] sm:$0xf]
      %v1500 = vrot.slane %v1388, 4
      %v1505 = vunpack.c.l.b16 %v1495
      %v1506 = vunpack.c.l.b16 %v1496
      %v1507 = vunpack.c.l.b16 %v1497
      %v1508 = vunpack.c.l.b16 %v1498
      %v1509 = vpack.c.b16 %v1506, %v1505
      %v1510 = vpack.c.b16 %v1508, %v1507
      %v1514 = vsel %vm1413, %v1500, 0
      %1516 = vmatprep.subr.bf16.mxu0 0
      %1517 = vmatpush1.bf16.msra.mxu0 %v1509
      %1518 = vmatprep.subr.bf16.mxu0 0
      %1519 = vmatpush1.bf16.msra.mxu0 %v1510
      %1520 = vmatprep.subr.bf16.mxu0 0
      %1521 = vmatpush1.bf16.msra.mxu0 0
      %1522 = vmatprep.subr.bf16.mxu0 0
      %1523 = vmatpush1.bf16.msra.mxu0 0
      %1524 = vmatprep.subr.bf16.mxu0 0
      %1525 = vmatpush1.bf16.msra.mxu0 0
      %1526 = vmatprep.subr.bf16.mxu0 0
      %1527 = vmatpush1.bf16.msra.mxu0 0
      %1528 = vmatprep.subr.bf16.mxu0 0
      %1529 = vmatpush1.bf16.msra.mxu0 0
      %1530 = vmatprep.subr.bf16.mxu0 0
      %1531 = vmatpush1.bf16.msra.mxu0 0
      %1532 = vmatprep.subr.bf16.mxu0 0
      %1533 = vmatpush1.bf16.msra.mxu0 0
      %1534 = vmatprep.subr.bf16.mxu0 0
      %1535 = vmatpush1.bf16.msra.mxu0 0
      %1536 = vmatprep.subr.bf16.mxu0 0
      %1537 = vmatpush1.bf16.msra.mxu0 0
      %1538 = vmatprep.subr.bf16.mxu0 0
      %1539 = vmatpush1.bf16.msra.mxu0 0
      %1540 = vmatprep.subr.bf16.mxu0 0
      %1541 = vmatpush1.bf16.msra.mxu0 0
      %1542 = vmatprep.subr.bf16.mxu0 0
      %1543 = vmatpush1.bf16.msra.mxu0 0
      %1544 = vmatprep.subr.bf16.mxu0 0
      %1545 = vmatpush1.bf16.msra.mxu0 0
      %1546 = vmatprep.subr.bf16.mxu0 0
      %1547 = vmatpush1.bf16.msra.mxu0 0
      %1548 = vmatprep.mubr.bf16.mxu0 0
      %1549 = vmatmul.mubr.bf16.gmra.mrb[0].mxu0 %v1514
      %v1550 = vpop.f32.mrb[0].mxu0
      %v1551 = vadd.f32 0.0, %v1550
      %v1552 = vpop.f32.mrb[0].mxu0
      %v1553 = vpop.f32.mrb[0].mxu0
      %v1554 = vpop.f32.mrb[0].mxu0
      %1555 = vdwg.mxu0
      %v1560 = vunpack.c.l.b16 %v1490
      %v1561 = vunpack.c.l.b16 %v1491
      %v1562 = vunpack.c.l.b16 %v1492
      %v1563 = vunpack.c.l.b16 %v1493
      %v1564 = vpack.c.b16 %v1561, %v1560
      %v1565 = vpack.c.b16 %v1563, %v1562
      %1568 = vmatprep.subr.bf16.mxu0 0
      %1569 = vmatpush1.bf16.msra.mxu0 %v1564
      %1570 = vmatprep.subr.bf16.mxu0 0
      %1571 = vmatpush1.bf16.msra.mxu0 %v1565
      %1572 = vmatprep.subr.bf16.mxu0 0
      %1573 = vmatpush1.bf16.msra.mxu0 0
      %1574 = vmatprep.subr.bf16.mxu0 0
      %1575 = vmatpush1.bf16.msra.mxu0 0
      %1576 = vmatprep.subr.bf16.mxu0 0
      %1577 = vmatpush1.bf16.msra.mxu0 0
      %1578 = vmatprep.subr.bf16.mxu0 0
      %1579 = vmatpush1.bf16.msra.mxu0 0
      %1580 = vmatprep.subr.bf16.mxu0 0
      %1581 = vmatpush1.bf16.msra.mxu0 0
      %1582 = vmatprep.subr.bf16.mxu0 0
      %1583 = vmatpush1.bf16.msra.mxu0 0
      %1584 = vmatprep.subr.bf16.mxu0 0
      %1585 = vmatpush1.bf16.msra.mxu0 0
      %1586 = vmatprep.subr.bf16.mxu0 0
      %1587 = vmatpush1.bf16.msra.mxu0 0
      %1588 = vmatprep.subr.bf16.mxu0 0
      %1589 = vmatpush1.bf16.msra.mxu0 0
      %1590 = vmatprep.subr.bf16.mxu0 0
      %1591 = vmatpush1.bf16.msra.mxu0 0
      %1592 = vmatprep.subr.bf16.mxu0 0
      %1593 = vmatpush1.bf16.msra.mxu0 0
      %1594 = vmatprep.subr.bf16.mxu0 0
      %1595 = vmatpush1.bf16.msra.mxu0 0
      %1596 = vmatprep.subr.bf16.mxu0 0
      %1597 = vmatpush1.bf16.msra.mxu0 0
      %1598 = vmatprep.subr.bf16.mxu0 0
      %1599 = vmatpush1.bf16.msra.mxu0 0
      %1600 = vmatprep.mubr.bf16.mxu0 0
      %1601 = vmatmul.mubr.bf16.gmra.mrb[0].mxu0 %v1415
      %v1602 = vpop.f32.mrb[0].mxu0
      %v1603 = vadd.f32 %v1551, %v1602
      %v1604 = vpop.f32.mrb[0].mxu0
      %v1605 = vpop.f32.mrb[0].mxu0
      %v1606 = vpop.f32.mrb[0].mxu0
      %1607 = vdwg.mxu0
      %s1608 = scalar_lea.vmem %s9, 32
      %v1609 = vld [vmem:[%s1608] sm:$0xf]
      %v1610 = vld [vmem:[%s1608 + $0x4] sm:$0xf]
      %v1611 = vld [vmem:[%s1608 + $0x8] sm:$0xf]
      %v1612 = vld [vmem:[%s1608 + $0xc] sm:$0xf]
      %v1617 = vunpack.c.l.b16 %v1609
      %v1618 = vunpack.c.l.b16 %v1610
      %v1619 = vunpack.c.l.b16 %v1611
      %v1620 = vunpack.c.l.b16 %v1612
      %v1621 = vpack.c.b16 %v1618, %v1617
      %v1622 = vpack.c.b16 %v1620, %v1619
      %1625 = vmatprep.subr.bf16.mxu0 0
      %1626 = vmatpush1.bf16.msra.mxu0 %v1621
      %1627 = vmatprep.subr.bf16.mxu0 0
      %1628 = vmatpush1.bf16.msra.mxu0 %v1622
      %1629 = vmatprep.subr.bf16.mxu0 0
      %1630 = vmatpush1.bf16.msra.mxu0 0
      %1631 = vmatprep.subr.bf16.mxu0 0
      %1632 = vmatpush1.bf16.msra.mxu0 0
      %1633 = vmatprep.subr.bf16.mxu0 0
      %1634 = vmatpush1.bf16.msra.mxu0 0
      %1635 = vmatprep.subr.bf16.mxu0 0
      %1636 = vmatpush1.bf16.msra.mxu0 0
      %1637 = vmatprep.subr.bf16.mxu0 0
      %1638 = vmatpush1.bf16.msra.mxu0 0
      %1639 = vmatprep.subr.bf16.mxu0 0
      %1640 = vmatpush1.bf16.msra.mxu0 0
      %1641 = vmatprep.subr.bf16.mxu0 0
      %1642 = vmatpush1.bf16.msra.mxu0 0
      %1643 = vmatprep.subr.bf16.mxu0 0
      %1644 = vmatpush1.bf16.msra.mxu0 0
      %1645 = vmatprep.subr.bf16.mxu0 0
      %1646 = vmatpush1.bf16.msra.mxu0 0
      %1647 = vmatprep.subr.bf16.mxu0 0
      %1648 = vmatpush1.bf16.msra.mxu0 0
      %1649 = vmatprep.subr.bf16.mxu0 0
      %1650 = vmatpush1.bf16.msra.mxu0 0
      %1651 = vmatprep.subr.bf16.mxu0 0
      %1652 = vmatpush1.bf16.msra.mxu0 0
      %1653 = vmatprep.subr.bf16.mxu0 0
      %1654 = vmatpush1.bf16.msra.mxu0 0
      %1655 = vmatprep.subr.bf16.mxu0 0
      %1656 = vmatpush1.bf16.msra.mxu0 0
      %1657 = vmatprep.mubr.bf16.mxu0 0
      %1658 = vmatmul.mubr.bf16.gmra.mrb[0].mxu0 %v1418
      %v1659 = vpop.f32.mrb[0].mxu0
      %v1660 = vadd.f32 0.0, %v1659
      %v1661 = vpop.f32.mrb[0].mxu0
      %v1662 = vpop.f32.mrb[0].mxu0
      %v1663 = vpop.f32.mrb[0].mxu0
      %1664 = vdwg.mxu0
      %v1665 = vadd.f32 %v1603, %v1660
      %s1666 = scalar_lea.vmem %s9, 48
      %v1667 = vld [vmem:[%s1666] sm:$0xf]
      %v1668 = vld [vmem:[%s1666 + $0x4] sm:$0xf]
      %v1669 = vld [vmem:[%s1666 + $0x8] sm:$0xf]
      %v1670 = vld [vmem:[%s1666 + $0xc] sm:$0xf]
      %v1672 = vrot.slane %v1389, 4
      %v1677 = vunpack.c.l.b16 %v1667
      %v1678 = vunpack.c.l.b16 %v1668
      %v1679 = vunpack.c.l.b16 %v1669
      %v1680 = vunpack.c.l.b16 %v1670
      %v1681 = vpack.c.b16 %v1678, %v1677
      %v1682 = vpack.c.b16 %v1680, %v1679
      %v1686 = vsel %vm1413, %v1672, 0
      %1688 = vmatprep.subr.bf16.mxu0 0
      %1689 = vmatpush1.bf16.msra.mxu0 %v1681
      %1690 = vmatprep.subr.bf16.mxu0 0
      %1691 = vmatpush1.bf16.msra.mxu0 %v1682
      %1692 = vmatprep.subr.bf16.mxu0 0
      %1693 = vmatpush1.bf16.msra.mxu0 0
      %1694 = vmatprep.subr.bf16.mxu0 0
      %1695 = vmatpush1.bf16.msra.mxu0 0
      %1696 = vmatprep.subr.bf16.mxu0 0
      %1697 = vmatpush1.bf16.msra.mxu0 0
      %1698 = vmatprep.subr.bf16.mxu0 0
      %1699 = vmatpush1.bf16.msra.mxu0 0
      %1700 = vmatprep.subr.bf16.mxu0 0
      %1701 = vmatpush1.bf16.msra.mxu0 0
      %1702 = vmatprep.subr.bf16.mxu0 0
      %1703 = vmatpush1.bf16.msra.mxu0 0
      %1704 = vmatprep.subr.bf16.mxu0 0
      %1705 = vmatpush1.bf16.msra.mxu0 0
      %1706 = vmatprep.subr.bf16.mxu0 0
      %1707 = vmatpush1.bf16.msra.mxu0 0
      %1708 = vmatprep.subr.bf16.mxu0 0
      %1709 = vmatpush1.bf16.msra.mxu0 0
      %1710 = vmatprep.subr.bf16.mxu0 0
      %1711 = vmatpush1.bf16.msra.mxu0 0
      %1712 = vmatprep.subr.bf16.mxu0 0
      %1713 = vmatpush1.bf16.msra.mxu0 0
      %1714 = vmatprep.subr.bf16.mxu0 0
      %1715 = vmatpush1.bf16.msra.mxu0 0
      %1716 = vmatprep.subr.bf16.mxu0 0
      %1717 = vmatpush1.bf16.msra.mxu0 0
      %1718 = vmatprep.subr.bf16.mxu0 0
      %1719 = vmatpush1.bf16.msra.mxu0 0
      %1720 = vmatprep.mubr.bf16.mxu0 0
      %1721 = vmatmul.mubr.bf16.gmra.mrb[0].mxu0 %v1686
      %v1722 = vpop.f32.mrb[0].mxu0
      %v1723 = vadd.f32 0.0, %v1722
      %v1724 = vpop.f32.mrb[0].mxu0
      %v1725 = vpop.f32.mrb[0].mxu0
      %v1726 = vpop.f32.mrb[0].mxu0
      %1727 = vdwg.mxu0
      %v1728 = vadd.f32 %v1665, %v1723
      %v1729 = vld [vmem:[%s10] sm:$0x1]
      %v1731 = vlaneseq
      %v1732 = vshrl.u32 %v1731, 7
      %v1733 = vsub.s32 0, %v1732
      %v1734 = vrot.slane %v1729, %v1733
      %v1736 = vadd.f32 %v1728, %v1734
      %v1737 = vmul.f32 %v1736, %v1736
      %v1738 = vmul.f32 %v1736, %v1737
      %v1739 = vmul.f32 %v1738, 0.044715
      %v1740 = vadd.f32 %v1736, %v1739
      %v1741 = vmul.f32 %v1740, 0.7978846
      %v1742 = vtanh.pop %v1741
      %v1743 = vadd.f32 %v1742, 1.0
      %v1744 = vmul.f32 %v1743, 0.5
      %v1745 = vmul.f32 %v1736, %v1744
      %v1746 = vpack.c.bf16 %v1745, %v1745
      %v1747 = vld [vmem:[%s11] sm:$0xf]
      %v1748 = vld [vmem:[%s11 + $0x4] sm:$0xf]
      %v1749 = vld [vmem:[%s11 + $0x8] sm:$0xf]
      %v1750 = vld [vmem:[%s11 + $0xc] sm:$0xf]
      %v1751 = vld [vmem:[%s11 + $0x10] sm:$0xf]
      %v1752 = vld [vmem:[%s11 + $0x14] sm:$0xf]
      %v1753 = vld [vmem:[%s11 + $0x18] sm:$0xf]
      %v1754 = vld [vmem:[%s11 + $0x1c] sm:$0xf]
      %v1755 = vld [vmem:[%s12] sm:$0x1]
      %v1757 = vlaneseq
      %v1758 = vshrl.u32 %v1757, 7
      %v1759 = vsub.s32 0, %v1758
      %v1760 = vrot.slane %v1755, %v1759
      %v1770 = vunpack.c.l.b16 %v1747
      %v1771 = vunpack.c.l.b16 %v1748
      %v1772 = vunpack.c.l.b16 %v1749
      %v1773 = vunpack.c.l.b16 %v1750
      %v1774 = vunpack.c.l.b16 %v1751
      %v1775 = vunpack.c.l.b16 %v1752
      %v1776 = vunpack.c.l.b16 %v1753
      %v1777 = vunpack.c.l.b16 %v1754
      %v1778 = vpack.c.b16 %v1771, %v1770
      %v1779 = vpack.c.b16 %v1773, %v1772
      %v1780 = vpack.c.b16 %v1775, %v1774
      %v1781 = vpack.c.b16 %v1777, %v1776
      %vm1786 = vcmask 523264
      %v1788 = vsel %vm1786, %v1746, 0
      %1790 = vmatprep.subr.bf16.mxu0 0
      %1791 = vmatpush1.bf16.msra.mxu0 %v1778
      %1792 = vmatprep.subr.bf16.mxu0 0
      %1793 = vmatpush1.bf16.msra.mxu0 %v1779
      %1794 = vmatprep.subr.bf16.mxu0 0
      %1795 = vmatpush1.bf16.msra.mxu0 %v1780
      %1796 = vmatprep.subr.bf16.mxu0 0
      %1797 = vmatpush1.bf16.msra.mxu0 %v1781
      %1798 = vmatprep.subr.bf16.mxu0 0
      %1799 = vmatpush1.bf16.msra.mxu0 0
      %1800 = vmatprep.subr.bf16.mxu0 0
      %1801 = vmatpush1.bf16.msra.mxu0 0
      %1802 = vmatprep.subr.bf16.mxu0 0
      %1803 = vmatpush1.bf16.msra.mxu0 0
      %1804 = vmatprep.subr.bf16.mxu0 0
      %1805 = vmatpush1.bf16.msra.mxu0 0
      %1806 = vmatprep.subr.bf16.mxu0 0
      %1807 = vmatpush1.bf16.msra.mxu0 0
      %1808 = vmatprep.subr.bf16.mxu0 0
      %1809 = vmatpush1.bf16.msra.mxu0 0
      %1810 = vmatprep.subr.bf16.mxu0 0
      %1811 = vmatpush1.bf16.msra.mxu0 0
      %1812 = vmatprep.subr.bf16.mxu0 0
      %1813 = vmatpush1.bf16.msra.mxu0 0
      %1814 = vmatprep.subr.bf16.mxu0 0
      %1815 = vmatpush1.bf16.msra.mxu0 0
      %1816 = vmatprep.subr.bf16.mxu0 0
      %1817 = vmatpush1.bf16.msra.mxu0 0
      %1818 = vmatprep.subr.bf16.mxu0 0
      %1819 = vmatpush1.bf16.msra.mxu0 0
      %1820 = vmatprep.subr.bf16.mxu0 0
      %1821 = vmatpush1.bf16.msra.mxu0 0
      %1822 = vmatprep.mubr.bf16.mxu0 0
      %1823 = vmatmul.mubr.bf16.gmra.mrb[0].mxu0 %v1788
      %v1824 = vpop.f32.mrb[0].mxu0
      %v1825 = vadd.f32 %v1760, %v1824
      %v1826 = vpop.f32.mrb[0].mxu0
      %v1827 = vpop.f32.mrb[0].mxu0
      %v1828 = vpop.f32.mrb[0].mxu0
      %1829 = vdwg.mxu0
      %v1830 = vpack.c.bf16 %v1825, %v1825
      %vm1831 = vcmask 257024
      %1832 = vst.msk [vmem:[%s521] sm:$0xf] %vm1831, %v1830
      %s1833 = smul.u32 16, %s27
      %p1834 = scmp.lt.s32.totalorder %s1833, 31
      %s1835 = scalar_select %p1834, %s1833, 31
      %s1836 = smul.addr %s1835, 4
      %s1837 = scalar_lea.vmem %s13, %s1836
      %s1838 = smul.u32 4, %s27
      %p1839 = scmp.lt.s32.totalorder %s1838, 7
      %s1840 = scalar_select %p1839, %s1838, 7
      %s1841 = smul.addr %s1840, 4
      %s1842 = scalar_lea.vmem %s14, %s1841
      %p1843 = scmp.lt.s32.totalorder %s27, 1
      %s1844 = scalar_select %p1843, %s27, 1
      %s1845 = smul.addr %s1844, 4
      %s1846 = scalar_lea.vmem %s15, %s1845
      // Predicated region
      $region73: #{image_encoder_forward.1} parent=71 // pred_check
        %p1847 = pneg %p323
      $region74: #{image_encoder_forward.1} parent=71 // pred_check_branch
        %1849 = sbr.rel (%p1847) target = $region76
      $region75: #{image_encoder_forward.1} parent=71 // pred_region
        %s1850 = smul.u32 16, %s27
      $region76: #{image_encoder_forward.1} parent=71 // pred_fallthru
        _
      // Predicated region
      $region77: #{image_encoder_forward.1} parent=71 // pred_check
        %p1851 = pneg %p349
      $region78: #{image_encoder_forward.1} parent=71 // pred_check_branch
        %1853 = sbr.rel (%p1851) target = $region80
      $region79: #{image_encoder_forward.1} parent=71 // pred_region
        %s1854 = smul.u32 4, %s27
      $region80: #{image_encoder_forward.1} parent=71 // pred_fallthru
        _
      // Predicated region
      $region81: #{image_encoder_forward.1} parent=71 // pred_check
        %p1855 = pneg %p375
      $region82: #{image_encoder_forward.1} parent=71 // pred_check_branch
        %1857 = sbr.rel (%p1855) target = $region84
      $region83: #{image_encoder_forward.1} parent=71 // pred_region
        _
      $region84: #{image_encoder_forward.1} parent=71 // pred_fallthru
        _
    $region72: #{image_encoder_forward.1} parent=5 // pred_fallthru
      _
    %p1858 = scmp.le.s32.totalorder 2, %s22
    // Predicated region
    $region85: #{image_encoder_forward.1} parent=5 // pred_check
      %p1859 = pneg %p1858
    $region86: #{image_encoder_forward.1} parent=5 // pred_check_branch
      %1861 = sbr.rel (%p1859) target = $region88
    $region87: #{image_encoder_forward.1} parent=5 // pred_region
      %s1862 = ssub.s32 %s22, 2
      // Predicated region
      $region89: #{image_encoder_forward.1} parent=87 // pred_check
        %p1863 = pneg %p329
      $region90: #{image_encoder_forward.1} parent=87 // pred_check_branch
        %1865 = sbr.rel (%p1863) target = $region92
      $region91: #{image_encoder_forward.1} parent=87 // pred_region
        %s1866 = smul.u32 16, %s28
        %p1867 = scmp.lt.s32.totalorder %s1866, 31
        %s1868 = scalar_select %p1867, %s1866, 31
        %s1869 = smul.addr %s1868, 4
        %s1870 = scalar_lea.vmem %s13, %s1869
      $region92: #{image_encoder_forward.1} parent=87 // pred_fallthru
        _
      // Predicated region
      $region93: #{image_encoder_forward.1} parent=87 // pred_check
        %p1871 = pneg %p355
      $region94: #{image_encoder_forward.1} parent=87 // pred_check_branch
        %1873 = sbr.rel (%p1871) target = $region96
      $region95: #{image_encoder_forward.1} parent=87 // pred_region
        %s1874 = smul.u32 4, %s28
        %p1875 = scmp.lt.s32.totalorder %s1874, 7
        %s1876 = scalar_select %p1875, %s1874, 7
        %s1877 = smul.addr %s1876, 4
        %s1878 = scalar_lea.vmem %s14, %s1877
      $region96: #{image_encoder_forward.1} parent=87 // pred_fallthru
        _
      // Predicated region
      $region97: #{image_encoder_forward.1} parent=87 // pred_check
        %p1879 = pneg %p381
      $region98: #{image_encoder_forward.1} parent=87 // pred_check_branch
        %1881 = sbr.rel (%p1879) target = $region100
      $region99: #{image_encoder_forward.1} parent=87 // pred_region
        %p1882 = scmp.lt.s32.totalorder %s28, 1
        %s1883 = scalar_select %p1882, %s28, 1
        %s1884 = smul.addr %s1883, 4
        %s1885 = scalar_lea.vmem %s15, %s1884
      $region100: #{image_encoder_forward.1} parent=87 // pred_fallthru
        _
    $region88: #{image_encoder_forward.1} parent=5 // pred_fallthru
      _
  $region6: #{image_encoder_forward.1} parent=0 // loop_footer
    %s26 = sadd.s32 1, %s22
  $region7: #{image_encoder_forward.1} parent=0 // loop_footer_branch
    %21 = sbr.rel target = $region3
  $region8: #{image_encoder_forward.1} parent=0 // loop_exit
    _

</llo_original>
